<compile_context>
chip_gen: v5e
topology: v5e:2x2
jax: 0.10.0
libtpu: 0.0.40
codegen_flags: <defaults>
</compile_context>

<pallas_src>
import functools

import jax
import jax.numpy as jnp
from jax.experimental import pallas as pl
from jax.experimental.pallas import tpu as pltpu

EPS = 1e-5
NEG_SLOPE = 0.2


def _leaky(v):
    return jnp.where(v > 0, v, NEG_SLOPE * v)


# ---------------------------------------------------------------------------
# In-kernel helpers
# ---------------------------------------------------------------------------
def _tile_mask_and_count(valid_nk, tm):
    """Lane-validity mask for the current m-tile (None when no padding) and valid count."""
    if valid_nk % tm == 0:
        return None, float(tm)
    col = pl.program_id(1) * tm + jax.lax.broadcasted_iota(jnp.int32, (1, tm), 1)
    mask = (col < valid_nk).astype(jnp.float32)
    return mask, jnp.sum(mask)


def _tile_stats(v, mask, n):
    """Per-tile [sum, centered-sumsq-about-tile-mean] -> (O, 2), one lane-contiguous store."""
    if mask is not None:
        v = v * mask
    s = jnp.sum(v, axis=-1, keepdims=True)           # (O, 1)
    c = s / n                                         # tile mean (recomputed identically in combine)
    d = v - c
    if mask is not None:
        d = d * mask
    q = jnp.sum(d * d, axis=-1, keepdims=True)        # (O, 1)
    return jnp.concatenate([s, q], axis=-1)            # (O, 2)


# ---------------------------------------------------------------------------
# Pass 1: partial BN0 statistics of h0 = W0 @ y.
#   y_ref: (F, TM) bf16, w0_ref: (O, F) f32, stats_ref: (O, 2) f32
# ---------------------------------------------------------------------------
def _stats0_kernel(y_ref, w0_ref, stats_ref, *, valid_nk, tm):
    h0 = jnp.dot(w0_ref[...], y_ref[...].astype(jnp.float32),
                 preferred_element_type=jnp.float32)            # (O, TM)
    mask, n = _tile_mask_and_count(valid_nk, tm)
    stats_ref[...] = _tile_stats(h0, mask, n)


# ---------------------------------------------------------------------------
# Pass 2: recompute h0, bn0+leaky, conv1 + adaptive contraction (unrolled over Cin),
#         emit res tile + partial BN1 statistics.
#   x_ref: (Cin, TM) bf16, y_ref: (F, TM) bf16, w0_ref: (O, F), w1_ref: (Cin, O, O),
#   s0_ref/c0_ref: (O, 1), res_ref: (O, TM) f32, stats_ref: (O, 2) f32
# ---------------------------------------------------------------------------
def _adaptive_kernel(x_ref, y_ref, w0_ref, w1_ref, s0_ref, c0_ref,
                     res_ref, stats_ref, *, cin, valid_nk, tm):
    h0 = jnp.dot(w0_ref[...], y_ref[...].astype(jnp.float32),
                 preferred_element_type=jnp.float32)             # (O, TM)
    a = _leaky(h0 * s0_ref[...] + c0_ref[...])                    # (O, TM)
    xv = x_ref[...].astype(jnp.float32)                           # (Cin, TM)

    # res[o, m] = sum_i sum_p w1[i, o, p] * a[p, m] * x[i, m]; keep only an (O, TM) live tile.
    acc = jnp.dot(w1_ref[0], a * xv[0:1, :], preferred_element_type=jnp.float32)
    for i in range(1, cin):
        acc = acc + jnp.dot(w1_ref[i], a * xv[i:i + 1, :],
                            preferred_element_type=jnp.float32)

    res_ref[...] = acc
    mask, n = _tile_mask_and_count(valid_nk, tm)
    stats_ref[...] = _tile_stats(acc, mask, n)


# ---------------------------------------------------------------------------
# Pass 3: apply bn1 (precomputed scale/bias) + leaky, in place over res.
# ---------------------------------------------------------------------------
def _finalize_kernel(res_ref, s1_ref, c1_ref, out_ref):
    out_ref[...] = _leaky(res_ref[...] * s1_ref[...] + c1_ref[...])


# ---------------------------------------------------------------------------
# Wrapper helpers
# ---------------------------------------------------------------------------
def _pick_tile(nk_pad, target):
    """Largest lane tile (multiple of 128) dividing nk_pad, capped at `target`."""
    tm = max(128, min(nk_pad, (target // 128) * 128))
    while nk_pad % tm:
        tm -= 128
    return tm


def _vmem_capacity_bytes():
    try:
        cap = getattr(pltpu.get_tpu_info(), "vmem_capacity_bytes", None)
        if cap:
            return int(cap)
    except Exception:
        pass
    return 64 * 1024 * 1024            # conservative (v7x-sized) fallback


def _scale_bias(parts, n_tiles, gamma, beta, count):
    """Combine per-tile (sum, centered-sumsq) partials into BN scale/bias of shape (O, 1)."""
    s = parts[..., 0]                                  # (B, MT, O)
    q = parts[..., 1]                                  # (B, MT, O)
    n = n_tiles.reshape(1, -1, 1)                      # (1, MT, 1)
    mean = jnp.sum(s, axis=(0, 1)) / count             # (O,)
    c = s / n                                          # per-tile means (match in-kernel centers)
    m2 = jnp.sum(q, axis=(0, 1)) + jnp.sum(n * (c - mean) ** 2, axis=(0, 1))
    var = jnp.maximum(m2 / count, 0.0)
    scale = gamma * jax.lax.rsqrt(var + EPS)
    bias = beta - mean * scale
    return scale.reshape(-1, 1), bias.reshape(-1, 1)


def adaptive_conv(x, y, w0, w1, g0, b0, g1, b1, *,
                  input_dtype=jnp.bfloat16, tile_target=None):
    """x: (B, Cin, N, K); y: (B, F, N, K); w0: (O, F); w1: (O*Cin, O) (torch row order o*Cin+i).
       Returns (B, O, N, K), matching PyTorch AdaptiveConv.forward with train-mode BN."""
    B, Cin, N, K = x.shape
    F = y.shape[1]
    O = w0.shape[0]
    NK = N * K
    M = B * NK

    # Free NCHW reshape: channels on sublanes, N*K on lanes. Inputs travel as bf16.
    x3 = x.reshape(B, Cin, NK).astype(input_dtype)
    y3 = y.reshape(B, F, NK).astype(input_dtype)
    w0_k = w0.astype(jnp.float32)                                                 # (O, F)
    # conv1 rows reordered so w1_k[i, o, :] = w1[o*Cin + i, :] (Cin outermost).
    w1_k = jnp.transpose(w1.reshape(O, Cin, O), (1, 0, 2)).astype(jnp.float32)    # (Cin, O, O)

    # Pad lanes to a multiple of 128: always the lane-dense big-tile path, never a
    # full-extent fallback. Stats kernels mask the padded lanes.
    NK_pad = ((NK + 127) // 128) * 128
    if NK_pad != NK:
        pad = ((0, 0), (0, 0), (0, NK_pad - NK))
        x3 = jnp.pad(x3, pad)
        y3 = jnp.pad(y3, pad)

    # Generation-aware VMEM cap: ~40 MiB on 64-MiB parts (v7x), ~80 MiB on 128-MiB parts.
    vmem_cap = _vmem_capacity_bytes()
    vmem_limit = int(vmem_cap * 5 // 8)
    if tile_target is None:
        tile_target = 32768 if vmem_cap >= 96 * 1024 * 1024 else 16384
    # Megacore balance (v7x): keep at least two grid steps when B == 1.
    if B == 1 and NK_pad >= 256:
        tile_target = min(tile_target, NK_pad // 2)

    in_bytes = jnp.dtype(input_dtype).itemsize

    def step_bytes(tm):
        # double-buffered input/output tiles + f32 in-kernel intermediates + weights
        return tm * (2 * in_bytes * (Cin + F) + 6 * 4 * O) + 4 * (Cin * O * O + O * F + 4 * O)

    TM = _pick_tile(NK_pad, tile_target)
    while TM > 128 and step_bytes(TM) > vmem_limit // 2:
        TM = _pick_tile(NK_pad, TM - 128)

    MT = NK_pad // TM
    grid = (B, MT)

    cparams = pltpu.CompilerParams(
        dimension_semantics=("parallel", "parallel"),
        vmem_limit_bytes=vmem_limit,
    )

    def tile_spec(ch):
        return pl.BlockSpec((pl.Squeezed(), ch, TM), lambda b, m: (b, 0, m))

    def full_spec(shape):
        return pl.BlockSpec(shape, lambda b, m: (0,) * len(shape))

    stats_spec = pl.BlockSpec((pl.Squeezed(), pl.Squeezed(), O, 2),
                              lambda b, m: (b, m, 0, 0))

    # Valid (unpadded) lane count of each m-tile for the stats combine.
    n_tiles = jnp.full((MT,), float(TM), jnp.float32)
    n_tiles = n_tiles.at[MT - 1].set(float(NK - (MT - 1) * TM))

    g0f, b0f = g0.astype(jnp.float32), b0.astype(jnp.float32)
    g1f, b1f = g1.astype(jnp.float32), b1.astype(jnp.float32)

    # ---- pass 1: BN0 statistics of h0 = W0 @ y ------------------------------
    stats0 = pl.pallas_call(
        functools.partial(_stats0_kernel, valid_nk=NK, tm=TM),
        out_shape=jax.ShapeDtypeStruct((B, MT, O, 2), jnp.float32),
        grid=grid,
        in_specs=[tile_spec(F), full_spec((O, F))],
        out_specs=stats_spec,
        compiler_params=cparams,
    )(y3, w0_k)
    # TODO(synk): if real configs have F >> 2*O, store h0 here and reuse it in pass 2
    #             instead of re-reading y (HBM trade: F*M re-read vs 2*O*M write+read).
    scale0, bias0 = _scale_bias(stats0, n_tiles, g0f, b0f, M)

    # ---- pass 2: bn0+leaky, conv1 + adaptive contraction, BN1 stats ---------
    res, stats1 = pl.pallas_call(
        functools.partial(_adaptive_kernel, cin=Cin, valid_nk=NK, tm=TM),
        out_shape=(jax.ShapeDtypeStruct((B, O, NK_pad), jnp.float32),
                   jax.ShapeDtypeStruct((B, MT, O, 2), jnp.float32)),
        grid=grid,
        in_specs=[tile_spec(Cin), tile_spec(F),
                  full_spec((O, F)), full_spec((Cin, O, O)),
                  full_spec((O, 1)), full_spec((O, 1))],
        out_specs=(tile_spec(O), stats_spec),
        compiler_params=cparams,
    )(x3, y3, w0_k, w1_k, scale0, bias0)
    scale1, bias1 = _scale_bias(stats1, n_tiles, g1f, b1f, M)

    # ---- pass 3: BN1 + leaky, written in place over res ----------------------
    out = pl.pallas_call(
        _finalize_kernel,
        out_shape=jax.ShapeDtypeStruct((B, O, NK_pad), jnp.float32),
        grid=grid,
        in_specs=[tile_spec(O), full_spec((O, 1)), full_spec((O, 1))],
        out_specs=tile_spec(O),
        input_output_aliases={0: 0},
        compiler_params=cparams,
    )(res, scale1, bias1)

    if NK_pad != NK:
        out = out[:, :, :NK]
    return out.reshape(B, O, N, K)


# ---------------- pure-JAX reference (mirrors the PyTorch code) ----------------
def _bn_train_ref(t, gamma, beta):
    m = t.mean(axis=(0, 2, 3), keepdims=True)
    v = ((t - m) ** 2).mean(axis=(0, 2, 3), keepdims=True)
    return (t - m) / jnp.sqrt(v + EPS) * gamma.reshape(1, -1, 1, 1) + beta.reshape(1, -1, 1, 1)


def adaptive_conv_ref(x, y, w0, w1, g0, b0, g1, b1):
    B, Cin, N, K = x.shape
    O = w0.shape[0]
    h0 = jnp.einsum('bfnk,of->bonk', y, w0)
    a = _leaky(_bn_train_ref(h0, g0, b0))
    h1 = jnp.einsum('bonk,co->bcnk', a, w1)                        # c = o*Cin + i
    yv = jnp.transpose(h1, (0, 2, 3, 1)).reshape(B, N, K, O, Cin)
    xv = jnp.transpose(x, (0, 2, 3, 1))[..., None]                 # (B,N,K,Cin,1)
    r = jnp.matmul(yv, xv)[..., 0]                                 # (B,N,K,O)
    r = jnp.transpose(r, (0, 3, 1, 2))
    return _leaky(_bn_train_ref(r, g1, b1))


if __name__ == "__main__":
    # Small shapes consistent with the module:
    B, in_channels, num_points, k = 2, 4, 16, 8
    feat_channels, out_channels = 32, 16

    key = jax.random.PRNGKey(0)
    kx, ky, kw0, kw1, kg0, kb0, kg1, kb1 = jax.random.split(key, 8)

    x = jax.random.normal(kx, (B, in_channels, num_points, k), jnp.float32)
    y = jax.random.normal(ky, (B, feat_channels, num_points, k), jnp.float32)

    # Same shapes as the PyTorch module's weights (1x1 conv kernel dims squeezed out).
    w0 = jax.random.normal(kw0, (out_channels, feat_channels), jnp.float32) * 0.1
    w1 = jax.random.normal(kw1, (out_channels * in_channels, out_channels), jnp.float32) * 0.1
    g0 = 1.0 + 0.1 * jax.random.normal(kg0, (out_channels,), jnp.float32)
    b0 = 0.1 * jax.random.normal(kb0, (out_channels,), jnp.float32)
    g1 = 1.0 + 0.1 * jax.random.normal(kg1, (out_channels,), jnp.float32)
    b1 = 0.1 * jax.random.normal(kb1, (out_channels,), jnp.float32)

    fwd = jax.jit(adaptive_conv)
    out = jax.block_until_ready(fwd(x, y, w0, w1, g0, b0, g1, b1))
    assert out.shape == (B, out_channels, num_points, k)

    # Reference on bf16-rounded inputs (the kernel moves x/y through HBM as bf16,
    # all accumulation stays f32).
    xq = x.astype(jnp.bfloat16).astype(jnp.float32)
    yq = y.astype(jnp.bfloat16).astype(jnp.float32)
    ref = adaptive_conv_ref(xq, yq, w0, w1, g0, b0, g1, b1)
    err = float(jnp.max(jnp.abs(out - ref)))
    assert jnp.allclose(out, ref, rtol=2e-3, atol=2e-3), err

    print("KERNEL_OK")
</pallas_src>

<mosaic_0001>
module attributes {stable_mosaic.version = 11 : i64} {
  func.func @_stats0_kernel(%arg0: i32, %arg1: i32, %arg2: memref<1x32x128xbf16, #tpu.memory_space<vmem>>, %arg3: memref<16x32xf32, #tpu.memory_space<vmem>>, %arg4: memref<1x1x16x2xf32, #tpu.memory_space<vmem>>) attributes {dimension_semantics = [#tpu.dimension_semantics<parallel>, #tpu.dimension_semantics<parallel>], iteration_bounds = array<i64: 2, 1>, scalar_prefetch = 0 : i64, scratch_operands = 0 : i64, tpu.core_type = #tpu.core_type<tc>, window_params = [{transform_indices = @transform_0, window_bounds = array<i64: 1, 32, 128>}, {pipeline_mode = #tpu.pipeline_mode<synchronous>, transform_indices = @transform_1, window_bounds = array<i64: 16, 32>}, {transform_indices = @transform_2, window_bounds = array<i64: 1, 1, 16, 2>}]} {
    %c0 = arith.constant 0 : index
    %c0_0 = arith.constant 0 : index
    %0 = vector.load %arg3[%c0, %c0_0] : memref<16x32xf32, #tpu.memory_space<vmem>>, vector<16x32xf32>
    %c0_1 = arith.constant 0 : index
    %c0_2 = arith.constant 0 : index
    %c0_3 = arith.constant 0 : index
    %1 = vector.load %arg2[%c0_1, %c0_2, %c0_3] : memref<1x32x128xbf16, #tpu.memory_space<vmem>>, vector<1x32x128xbf16>
    %2 = vector.shape_cast %1 : vector<1x32x128xbf16> to vector<32x128xbf16>
    %3 = arith.extf %2 : vector<32x128xbf16> to vector<32x128xf32>
    %cst = arith.constant dense<0.000000e+00> : vector<16x128xf32>
    %4 = tpu.matmul %0, %3, %cst {dimension_numbers = #tpu.dot_dimension_numbers<[1], [0], [0], [1], [0, 0, 1, 1], [], []>} : vector<16x32xf32>, vector<32x128xf32>, vector<16x128xf32> -> vector<16x128xf32>
    %cst_4 = arith.constant dense<0.000000e+00> : vector<16xf32>
    %5 = vector.multi_reduction <add>, %4, %cst_4 [1] : vector<16x128xf32> to vector<16xf32>
    %6 = vector.shape_cast %5 : vector<16xf32> to vector<16x1xf32>
    %cst_5 = arith.constant 1.280000e+02 : f32
    %7 = vector.broadcast %cst_5 : f32 to vector<16x1xf32>
    %8 = arith.divf %6, %7 : vector<16x1xf32>
    %9 = vector.broadcast %8 : vector<16x1xf32> to vector<16x128xf32>
    %10 = arith.subf %4, %9 : vector<16x128xf32>
    %11 = arith.mulf %10, %10 : vector<16x128xf32>
    %cst_6 = arith.constant dense<0.000000e+00> : vector<16xf32>
    %12 = vector.multi_reduction <add>, %11, %cst_6 [1] : vector<16x128xf32> to vector<16xf32>
    %13 = vector.shape_cast %12 : vector<16xf32> to vector<16x1xf32>
    %14 = tpu.concatenate %6, %13 in 1 : vector<16x1xf32>, vector<16x1xf32> -> vector<16x2xf32>
    %c0_7 = arith.constant 0 : index
    %c0_8 = arith.constant 0 : index
    %c0_9 = arith.constant 0 : index
    %c0_10 = arith.constant 0 : index
    %15 = vector.load %arg4[%c0_7, %c0_8, %c0_9, %c0_10] : memref<1x1x16x2xf32, #tpu.memory_space<vmem>>, vector<1x1x16x2xf32>
    %16 = vector.shape_cast %15 : vector<1x1x16x2xf32> to vector<16x2xf32>
    %17 = vector.shape_cast %14 : vector<16x2xf32> to vector<1x1x16x2xf32>
    tpu.vector_store %arg4[%c0_7, %c0_8, %c0_9, %c0_10], %17 {strides = array<i32>} : memref<1x1x16x2xf32, #tpu.memory_space<vmem>>, vector<1x1x16x2xf32>,
    return
  }
  func.func @transform_0(%arg0: i32, %arg1: i32) -> (i32, i32, i32) {
    %c0_i32 = arith.constant 0 : i32
    %c0_i32_0 = arith.constant 0 : i32
    return %arg0, %c0_i32, %arg1 : i32, i32, i32
  }
  func.func @transform_1(%arg0: i32, %arg1: i32) -> (i32, i32) {
    %c0_i32 = arith.constant 0 : i32
    %c0_i32_0 = arith.constant 0 : i32
    %c0_i32_1 = arith.constant 0 : i32
    return %c0_i32, %c0_i32_0 : i32, i32
  }
  func.func @transform_2(%arg0: i32, %arg1: i32) -> (i32, i32, i32, i32) {
    %c0_i32 = arith.constant 0 : i32
    %c0_i32_0 = arith.constant 0 : i32
    %c0_i32_1 = arith.constant 0 : i32
    return %arg0, %arg1, %c0_i32, %c0_i32_0 : i32, i32, i32, i32
  }
}

module attributes {stable_mosaic.version = 11 : i64} {
  func.func @_finalize_kernel(%arg0: i32, %arg1: i32, %arg2: memref<1x16x128xf32, #tpu.memory_space<vmem>>, %arg3: memref<16x1xf32, #tpu.memory_space<vmem>>, %arg4: memref<16x1xf32, #tpu.memory_space<vmem>>, %arg5: memref<1x16x128xf32, #tpu.memory_space<vmem>>) attributes {dimension_semantics = [#tpu.dimension_semantics<parallel>, #tpu.dimension_semantics<parallel>], iteration_bounds = array<i64: 2, 1>, scalar_prefetch = 0 : i64, scratch_operands = 0 : i64, tpu.core_type = #tpu.core_type<tc>, window_params = [{transform_indices = @transform_0, window_bounds = array<i64: 1, 16, 128>}, {pipeline_mode = #tpu.pipeline_mode<synchronous>, transform_indices = @transform_1, window_bounds = array<i64: 16, 1>}, {pipeline_mode = #tpu.pipeline_mode<synchronous>, transform_indices = @transform_2, window_bounds = array<i64: 16, 1>}, {transform_indices = @transform_3, window_bounds = array<i64: 1, 16, 128>}]} {
    %c0 = arith.constant 0 : index
    %c0_0 = arith.constant 0 : index
    %c0_1 = arith.constant 0 : index
    %0 = vector.load %arg2[%c0, %c0_0, %c0_1] : memref<1x16x128xf32, #tpu.memory_space<vmem>>, vector<1x16x128xf32>
    %1 = vector.shape_cast %0 : vector<1x16x128xf32> to vector<16x128xf32>
    %c0_2 = arith.constant 0 : index
    %c0_3 = arith.constant 0 : index
    %2 = vector.load %arg3[%c0_2, %c0_3] : memref<16x1xf32, #tpu.memory_space<vmem>>, vector<16x1xf32>
    %3 = vector.broadcast %2 : vector<16x1xf32> to vector<16x128xf32>
    %4 = arith.mulf %1, %3 : vector<16x128xf32>
    %c0_4 = arith.constant 0 : index
    %c0_5 = arith.constant 0 : index
    %5 = vector.load %arg4[%c0_4, %c0_5] : memref<16x1xf32, #tpu.memory_space<vmem>>, vector<16x1xf32>
    %6 = vector.broadcast %5 : vector<16x1xf32> to vector<16x128xf32>
    %7 = arith.addf %4, %6 : vector<16x128xf32>
    %cst = arith.constant 0.000000e+00 : f32
    %8 = vector.broadcast %cst : f32 to vector<16x128xf32>
    %9 = arith.cmpf ogt, %7, %8 : vector<16x128xf32>
    %cst_6 = arith.constant 2.000000e-01 : f32
    %10 = vector.broadcast %cst_6 : f32 to vector<16x128xf32>
    %11 = arith.mulf %10, %7 : vector<16x128xf32>
    %12 = arith.select %9, %7, %11 : vector<16x128xi1>, vector<16x128xf32>
    %c0_7 = arith.constant 0 : index
    %c0_8 = arith.constant 0 : index
    %c0_9 = arith.constant 0 : index
    %13 = vector.load %arg5[%c0_7, %c0_8, %c0_9] : memref<1x16x128xf32, #tpu.memory_space<vmem>>, vector<1x16x128xf32>
    %14 = vector.shape_cast %13 : vector<1x16x128xf32> to vector<16x128xf32>
    %15 = vector.shape_cast %12 : vector<16x128xf32> to vector<1x16x128xf32>
    tpu.vector_store %arg5[%c0_7, %c0_8, %c0_9], %15 {strides = array<i32>} : memref<1x16x128xf32, #tpu.memory_space<vmem>>, vector<1x16x128xf32>,
    return
  }
  func.func @transform_0(%arg0: i32, %arg1: i32) -> (i32, i32, i32) {
    %c0_i32 = arith.constant 0 : i32
    %c0_i32_0 = arith.constant 0 : i32
    return %arg0, %c0_i32, %arg1 : i32, i32, i32
  }
  func.func @transform_1(%arg0: i32, %arg1: i32) -> (i32, i32) {
    %c0_i32 = arith.constant 0 : i32
    %c0_i32_0 = arith.constant 0 : i32
    %c0_i32_1 = arith.constant 0 : i32
    return %c0_i32, %c0_i32_0 : i32, i32
  }
  func.func @transform_2(%arg0: i32, %arg1: i32) -> (i32, i32) {
    %c0_i32 = arith.constant 0 : i32
    %c0_i32_0 = arith.constant 0 : i32
    %c0_i32_1 = arith.constant 0 : i32
    return %c0_i32, %c0_i32_0 : i32, i32
  }
  func.func @transform_3(%arg0: i32, %arg1: i32) -> (i32, i32, i32) {
    %c0_i32 = arith.constant 0 : i32
    %c0_i32_0 = arith.constant 0 : i32
    return %arg0, %c0_i32, %arg1 : i32, i32, i32
  }
}

module attributes {stable_mosaic.version = 11 : i64} {
  func.func @_adaptive_kernel(%arg0: i32, %arg1: i32, %arg2: memref<1x4x128xbf16, #tpu.memory_space<vmem>>, %arg3: memref<1x32x128xbf16, #tpu.memory_space<vmem>>, %arg4: memref<16x32xf32, #tpu.memory_space<vmem>>, %arg5: memref<4x16x16xf32, #tpu.memory_space<vmem>>, %arg6: memref<16x1xf32, #tpu.memory_space<vmem>>, %arg7: memref<16x1xf32, #tpu.memory_space<vmem>>, %arg8: memref<1x16x128xf32, #tpu.memory_space<vmem>>, %arg9: memref<1x1x16x2xf32, #tpu.memory_space<vmem>>) attributes {dimension_semantics = [#tpu.dimension_semantics<parallel>, #tpu.dimension_semantics<parallel>], iteration_bounds = array<i64: 2, 1>, scalar_prefetch = 0 : i64, scratch_operands = 0 : i64, tpu.core_type = #tpu.core_type<tc>, window_params = [{transform_indices = @transform_0, window_bounds = array<i64: 1, 4, 128>}, {transform_indices = @transform_1, window_bounds = array<i64: 1, 32, 128>}, {pipeline_mode = #tpu.pipeline_mode<synchronous>, transform_indices = @transform_2, window_bounds = array<i64: 16, 32>}, {pipeline_mode = #tpu.pipeline_mode<synchronous>, transform_indices = @transform_3, window_bounds = array<i64: 4, 16, 16>}, {pipeline_mode = #tpu.pipeline_mode<synchronous>, transform_indices = @transform_4, window_bounds = array<i64: 16, 1>}, {pipeline_mode = #tpu.pipeline_mode<synchronous>, transform_indices = @transform_5, window_bounds = array<i64: 16, 1>}, {transform_indices = @transform_6, window_bounds = array<i64: 1, 16, 128>}, {transform_indices = @transform_7, window_bounds = array<i64: 1, 1, 16, 2>}]} {
    %c0 = arith.constant 0 : index
    %c0_0 = arith.constant 0 : index
    %0 = vector.load %arg4[%c0, %c0_0] : memref<16x32xf32, #tpu.memory_space<vmem>>, vector<16x32xf32>
    %c0_1 = arith.constant 0 : index
    %c0_2 = arith.constant 0 : index
    %c0_3 = arith.constant 0 : index
    %1 = vector.load %arg3[%c0_1, %c0_2, %c0_3] : memref<1x32x128xbf16, #tpu.memory_space<vmem>>, vector<1x32x128xbf16>
    %2 = vector.shape_cast %1 : vector<1x32x128xbf16> to vector<32x128xbf16>
    %3 = arith.extf %2 : vector<32x128xbf16> to vector<32x128xf32>
    %cst = arith.constant dense<0.000000e+00> : vector<16x128xf32>
    %4 = tpu.matmul %0, %3, %cst {dimension_numbers = #tpu.dot_dimension_numbers<[1], [0], [0], [1], [0, 0, 1, 1], [], []>} : vector<16x32xf32>, vector<32x128xf32>, vector<16x128xf32> -> vector<16x128xf32>
    %c0_4 = arith.constant 0 : index
    %c0_5 = arith.constant 0 : index
    %5 = vector.load %arg6[%c0_4, %c0_5] : memref<16x1xf32, #tpu.memory_space<vmem>>, vector<16x1xf32>
    %6 = vector.broadcast %5 : vector<16x1xf32> to vector<16x128xf32>
    %7 = arith.mulf %4, %6 : vector<16x128xf32>
    %c0_6 = arith.constant 0 : index
    %c0_7 = arith.constant 0 : index
    %8 = vector.load %arg7[%c0_6, %c0_7] : memref<16x1xf32, #tpu.memory_space<vmem>>, vector<16x1xf32>
    %9 = vector.broadcast %8 : vector<16x1xf32> to vector<16x128xf32>
    %10 = arith.addf %7, %9 : vector<16x128xf32>
    %cst_8 = arith.constant 0.000000e+00 : f32
    %11 = vector.broadcast %cst_8 : f32 to vector<16x128xf32>
    %12 = arith.cmpf ogt, %10, %11 : vector<16x128xf32>
    %cst_9 = arith.constant 2.000000e-01 : f32
    %13 = vector.broadcast %cst_9 : f32 to vector<16x128xf32>
    %14 = arith.mulf %13, %10 : vector<16x128xf32>
    %15 = arith.select %12, %10, %14 : vector<16x128xi1>, vector<16x128xf32>
    %c0_10 = arith.constant 0 : index
    %c0_11 = arith.constant 0 : index
    %c0_12 = arith.constant 0 : index
    %16 = vector.load %arg2[%c0_10, %c0_11, %c0_12] : memref<1x4x128xbf16, #tpu.memory_space<vmem>>, vector<1x4x128xbf16>
    %17 = vector.shape_cast %16 : vector<1x4x128xbf16> to vector<4x128xbf16>
    %18 = arith.extf %17 : vector<4x128xbf16> to vector<4x128xf32>
    %c0_13 = arith.constant 0 : index
    %c0_14 = arith.constant 0 : index
    %c0_15 = arith.constant 0 : index
    %19 = vector.load %arg5[%c0_13, %c0_14, %c0_15] : memref<4x16x16xf32, #tpu.memory_space<vmem>>, vector<1x16x16xf32>
    %20 = vector.shape_cast %19 : vector<1x16x16xf32> to vector<16x16xf32>
    %21 = vector.extract_strided_slice %18 {offsets = [0, 0], sizes = [1, 128], strides = [1, 1]} : vector<4x128xf32> to vector<1x128xf32>
    %22 = vector.broadcast %21 : vector<1x128xf32> to vector<16x128xf32>
    %23 = arith.mulf %15, %22 : vector<16x128xf32>
    %cst_16 = arith.constant dense<0.000000e+00> : vector<16x128xf32>
    %24 = tpu.matmul %20, %23, %cst_16 {dimension_numbers = #tpu.dot_dimension_numbers<[1], [0], [0], [1], [0, 0, 1, 1], [], []>} : vector<16x16xf32>, vector<16x128xf32>, vector<16x128xf32> -> vector<16x128xf32>
    %c1 = arith.constant 1 : index
    %c0_17 = arith.constant 0 : index
    %c0_18 = arith.constant 0 : index
    %25 = vector.load %arg5[%c1, %c0_17, %c0_18] : memref<4x16x16xf32, #tpu.memory_space<vmem>>, vector<1x16x16xf32>
    %26 = vector.shape_cast %25 : vector<1x16x16xf32> to vector<16x16xf32>
    %27 = vector.extract_strided_slice %18 {offsets = [1, 0], sizes = [1, 128], strides = [1, 1]} : vector<4x128xf32> to vector<1x128xf32>
    %28 = vector.broadcast %27 : vector<1x128xf32> to vector<16x128xf32>
    %29 = arith.mulf %15, %28 : vector<16x128xf32>
    %cst_19 = arith.constant dense<0.000000e+00> : vector<16x128xf32>
    %30 = tpu.matmul %26, %29, %cst_19 {dimension_numbers = #tpu.dot_dimension_numbers<[1], [0], [0], [1], [0, 0, 1, 1], [], []>} : vector<16x16xf32>, vector<16x128xf32>, vector<16x128xf32> -> vector<16x128xf32>
    %31 = arith.addf %24, %30 : vector<16x128xf32>
    %c2 = arith.constant 2 : index
    %c0_20 = arith.constant 0 : index
    %c0_21 = arith.constant 0 : index
    %32 = vector.load %arg5[%c2, %c0_20, %c0_21] : memref<4x16x16xf32, #tpu.memory_space<vmem>>, vector<1x16x16xf32>
    %33 = vector.shape_cast %32 : vector<1x16x16xf32> to vector<16x16xf32>
    %34 = vector.extract_strided_slice %18 {offsets = [2, 0], sizes = [1, 128], strides = [1, 1]} : vector<4x128xf32> to vector<1x128xf32>
    %35 = vector.broadcast %34 : vector<1x128xf32> to vector<16x128xf32>
    %36 = arith.mulf %15, %35 : vector<16x128xf32>
    %cst_22 = arith.constant dense<0.000000e+00> : vector<16x128xf32>
    %37 = tpu.matmul %33, %36, %cst_22 {dimension_numbers = #tpu.dot_dimension_numbers<[1], [0], [0], [1], [0, 0, 1, 1], [], []>} : vector<16x16xf32>, vector<16x128xf32>, vector<16x128xf32> -> vector<16x128xf32>
    %38 = arith.addf %31, %37 : vector<16x128xf32>
    %c3 = arith.constant 3 : index
    %c0_23 = arith.constant 0 : index
    %c0_24 = arith.constant 0 : index
    %39 = vector.load %arg5[%c3, %c0_23, %c0_24] : memref<4x16x16xf32, #tpu.memory_space<vmem>>, vector<1x16x16xf32>
    %40 = vector.shape_cast %39 : vector<1x16x16xf32> to vector<16x16xf32>
    %41 = vector.extract_strided_slice %18 {offsets = [3, 0], sizes = [1, 128], strides = [1, 1]} : vector<4x128xf32> to vector<1x128xf32>
    %42 = vector.broadcast %41 : vector<1x128xf32> to vector<16x128xf32>
    %43 = arith.mulf %15, %42 : vector<16x128xf32>
    %cst_25 = arith.constant dense<0.000000e+00> : vector<16x128xf32>
    %44 = tpu.matmul %40, %43, %cst_25 {dimension_numbers = #tpu.dot_dimension_numbers<[1], [0], [0], [1], [0, 0, 1, 1], [], []>} : vector<16x16xf32>, vector<16x128xf32>, vector<16x128xf32> -> vector<16x128xf32>
    %45 = arith.addf %38, %44 : vector<16x128xf32>
    %c0_26 = arith.constant 0 : index
    %c0_27 = arith.constant 0 : index
    %c0_28 = arith.constant 0 : index
    %46 = vector.load %arg8[%c0_26, %c0_27, %c0_28] : memref<1x16x128xf32, #tpu.memory_space<vmem>>, vector<1x16x128xf32>
    %47 = vector.shape_cast %46 : vector<1x16x128xf32> to vector<16x128xf32>
    %48 = vector.shape_cast %45 : vector<16x128xf32> to vector<1x16x128xf32>
    tpu.vector_store %arg8[%c0_26, %c0_27, %c0_28], %48 {strides = array<i32>} : memref<1x16x128xf32, #tpu.memory_space<vmem>>, vector<1x16x128xf32>,
    %cst_29 = arith.constant dense<0.000000e+00> : vector<16xf32>
    %49 = vector.multi_reduction <add>, %45, %cst_29 [1] : vector<16x128xf32> to vector<16xf32>
    %50 = vector.shape_cast %49 : vector<16xf32> to vector<16x1xf32>
    %cst_30 = arith.constant 1.280000e+02 : f32
    %51 = vector.broadcast %cst_30 : f32 to vector<16x1xf32>
    %52 = arith.divf %50, %51 : vector<16x1xf32>
    %53 = vector.broadcast %52 : vector<16x1xf32> to vector<16x128xf32>
    %54 = arith.subf %45, %53 : vector<16x128xf32>
    %55 = arith.mulf %54, %54 : vector<16x128xf32>
    %cst_31 = arith.constant dense<0.000000e+00> : vector<16xf32>
    %56 = vector.multi_reduction <add>, %55, %cst_31 [1] : vector<16x128xf32> to vector<16xf32>
    %57 = vector.shape_cast %56 : vector<16xf32> to vector<16x1xf32>
    %58 = tpu.concatenate %50, %57 in 1 : vector<16x1xf32>, vector<16x1xf32> -> vector<16x2xf32>
    %c0_32 = arith.constant 0 : index
    %c0_33 = arith.constant 0 : index
    %c0_34 = arith.constant 0 : index
    %c0_35 = arith.constant 0 : index
    %59 = vector.load %arg9[%c0_32, %c0_33, %c0_34, %c0_35] : memref<1x1x16x2xf32, #tpu.memory_space<vmem>>, vector<1x1x16x2xf32>
    %60 = vector.shape_cast %59 : vector<1x1x16x2xf32> to vector<16x2xf32>
    %61 = vector.shape_cast %58 : vector<16x2xf32> to vector<1x1x16x2xf32>
    tpu.vector_store %arg9[%c0_32, %c0_33, %c0_34, %c0_35], %61 {strides = array<i32>} : memref<1x1x16x2xf32, #tpu.memory_space<vmem>>, vector<1x1x16x2xf32>,
    return
  }
  func.func @transform_0(%arg0: i32, %arg1: i32) -> (i32, i32, i32) {
    %c0_i32 = arith.constant 0 : i32
    %c0_i32_0 = arith.constant 0 : i32
    return %arg0, %c0_i32, %arg1 : i32, i32, i32
  }
  func.func @transform_1(%arg0: i32, %arg1: i32) -> (i32, i32, i32) {
    %c0_i32 = arith.constant 0 : i32
    %c0_i32_0 = arith.constant 0 : i32
    return %arg0, %c0_i32, %arg1 : i32, i32, i32
  }
  func.func @transform_2(%arg0: i32, %arg1: i32) -> (i32, i32) {
    %c0_i32 = arith.constant 0 : i32
    %c0_i32_0 = arith.constant 0 : i32
    %c0_i32_1 = arith.constant 0 : i32
    return %c0_i32, %c0_i32_0 : i32, i32
  }
  func.func @transform_3(%arg0: i32, %arg1: i32) -> (i32, i32, i32) {
    %c0_i32 = arith.constant 0 : i32
    %c0_i32_0 = arith.constant 0 : i32
    %c0_i32_1 = arith.constant 0 : i32
    %c0_i32_2 = arith.constant 0 : i32
    return %c0_i32, %c0_i32_0, %c0_i32_1 : i32, i32, i32
  }
  func.func @transform_4(%arg0: i32, %arg1: i32) -> (i32, i32) {
    %c0_i32 = arith.constant 0 : i32
    %c0_i32_0 = arith.constant 0 : i32
    %c0_i32_1 = arith.constant 0 : i32
    return %c0_i32, %c0_i32_0 : i32, i32
  }
  func.func @transform_5(%arg0: i32, %arg1: i32) -> (i32, i32) {
    %c0_i32 = arith.constant 0 : i32
    %c0_i32_0 = arith.constant 0 : i32
    %c0_i32_1 = arith.constant 0 : i32
    return %c0_i32, %c0_i32_0 : i32, i32
  }
  func.func @transform_6(%arg0: i32, %arg1: i32) -> (i32, i32, i32) {
    %c0_i32 = arith.constant 0 : i32
    %c0_i32_0 = arith.constant 0 : i32
    return %arg0, %c0_i32, %arg1 : i32, i32, i32
  }
  func.func @transform_7(%arg0: i32, %arg1: i32) -> (i32, i32, i32, i32) {
    %c0_i32 = arith.constant 0 : i32
    %c0_i32_0 = arith.constant 0 : i32
    %c0_i32_1 = arith.constant 0 : i32
    return %arg0, %arg1, %c0_i32, %c0_i32_0 : i32, i32, i32, i32
  }
}

</mosaic_0001>

<llo_original>
// kernel: adaptive_conv.5
$region0: #{adaptive_conv.5}
  #allocation0 [shape = 'u32[]', space=smem, size = 0x4, offset = 0x4, fixed_abs, tag = 'smem constant byte address 0x4 - core index']
  #allocation1 [shape = 'u32[72,128]{1,0:T(1,128)}', space=vmem, size = 0x9000, scoped, tag = 'internal scratch']
  %s0 = inlined_call_operand.vmem [shape: f32[2,16,128], index: 0, kind: input, shape index: {}, may-alias: {0,3}]
  %s1 = inlined_call_operand.vmem [shape: f32[16,1], index: 1, kind: input, shape index: {}]
  %s2 = inlined_call_operand.vmem [shape: f32[16,1], index: 2, kind: input, shape index: {}]
  %s3 = inlined_call_operand.vmem [shape: f32[2,16,128], index: 3, kind: output, shape index: {}, may-alias: {0,3}]
  %s4 = sld [smem:[#allocation0]]
  $region45: #{adaptive_conv.5} parent=0
    _
  %s6 = ssub.s32 1, %s4
  %s7 = scalar_select 0, %s6, %s4
  loop: start=0, step=1, limit=4
  $region2: #{adaptive_conv.5} parent=0 // loop_pre_header
    _
  $region3: #{adaptive_conv.5} parent=0 // loop_header
    %s9 = sphi 0, %s13
    %p10 = scmp.ge.s32.totalorder %s9, 4
    %s16 = sphi 0, %s28
    %s17 = sphi 0, %s24
    %s18 = sphi 0, %s16
    %s19 = sphi 0, %s17
    %s20 = sphi 0, %s18
    %s21 = sphi 0, %s19
    %s33 = sphi 0, %s35
    %s36 = sphi 0, %s33
    %s37 = sphi 0, %s36
    %s53 = sphi 0, %s37
    %s57 = sphi 0, %s57
    %s59 = sphi 0, %s57
    %s60 = sphi 0, %s59
    %s74 = sphi 0, %s60
    %s78 = sphi 0, %s78
    %s80 = sphi 0, %s78
    %s81 = sphi 0, %s80
    %s95 = sphi 0, %s81
    %s103 = sphi 0, %s105
    %s106 = sphi 0, %s103
    %s107 = sphi 0, %s106
    %s123 = sphi 0, %s107
  $region4: #{adaptive_conv.5} parent=0 // loop_header_branch
    %12 = sbr.rel (%p10) target = $region8
  $region5: #{adaptive_conv.5} parent=0 // loop_body
    %s14 = ssub.s32 %s9, 1
    %s15 = ssub.s32 %s9, 2
    %s22 = sadd.s32 1, %s17
    %p23 = scmp.ge.s32.totalorder %s22, 1
    %s24 = scalar_select %p23, 0, %s22
    %s25 = sadd.s32 1, %s16
    %s26 = scalar_select %p23, %s25, %s16
    %p27 = scmp.ge.s32.totalorder %s26, 2
    %s28 = scalar_select %p27, 0, %s26
    %s29 = ssub.s32 %s16, %s28
    %s30 = ssub.s32 %s17, %s24
    %s31 = sor.u32 %s29, %s30
    %p32 = scmp.eq.s32.totalorder %s31, 0
    %s34 = sadd.s32 %s33, 1
    %s35 = scalar_select %p32, %s33, %s34
    %p38 = pneg %p32
    %p39 = scmp.eq.s32.totalorder %s9, 1
    %p40 = por %p38, %p39
    %p41 = scmp.ne.s32.totalorder %s33, %s36
    %p42 = scmp.eq.s32.totalorder %s9, 0
    %p43 = por %p41, %p42
    %p44 = scmp.ne.s32.totalorder %s33, %s36
    %p45 = scmp.eq.s32.totalorder %s14, 1
    %p46 = por %p44, %p45
    %p47 = scmp.ne.s32.totalorder %s36, %s37
    %p48 = scmp.eq.s32.totalorder %s14, 0
    %p49 = por %p47, %p48
    %p50 = scmp.ne.s32.totalorder %s36, %s37
    %p51 = scmp.eq.s32.totalorder %s15, 1
    %p52 = por %p50, %p51
    %p54 = scmp.ne.s32.totalorder %s37, %s53
    %p55 = scmp.eq.s32.totalorder %s15, 0
    %p56 = por %p54, %p55
    %s58 = sadd.s32 %s57, 1
    %p61 = scmp.eq.s32.totalorder %s9, 1
    %p62 = scmp.ne.s32.totalorder %s57, %s59
    %p63 = scmp.eq.s32.totalorder %s9, 0
    %p64 = por %p62, %p63
    %p65 = scmp.ne.s32.totalorder %s57, %s59
    %p66 = scmp.eq.s32.totalorder %s14, 1
    %p67 = por %p65, %p66
    %p68 = scmp.ne.s32.totalorder %s59, %s60
    %p69 = scmp.eq.s32.totalorder %s14, 0
    %p70 = por %p68, %p69
    %p71 = scmp.ne.s32.totalorder %s59, %s60
    %p72 = scmp.eq.s32.totalorder %s15, 1
    %p73 = por %p71, %p72
    %p75 = scmp.ne.s32.totalorder %s60, %s74
    %p76 = scmp.eq.s32.totalorder %s15, 0
    %p77 = por %p75, %p76
    %s79 = sadd.s32 %s78, 1
    %p82 = scmp.eq.s32.totalorder %s9, 1
    %p83 = scmp.ne.s32.totalorder %s78, %s80
    %p84 = scmp.eq.s32.totalorder %s9, 0
    %p85 = por %p83, %p84
    %p86 = scmp.ne.s32.totalorder %s78, %s80
    %p87 = scmp.eq.s32.totalorder %s14, 1
    %p88 = por %p86, %p87
    %p89 = scmp.ne.s32.totalorder %s80, %s81
    %p90 = scmp.eq.s32.totalorder %s14, 0
    %p91 = por %p89, %p90
    %p92 = scmp.ne.s32.totalorder %s80, %s81
    %p93 = scmp.eq.s32.totalorder %s15, 1
    %p94 = por %p92, %p93
    %p96 = scmp.ne.s32.totalorder %s81, %s95
    %p97 = scmp.eq.s32.totalorder %s15, 0
    %p98 = por %p96, %p97
    %s99 = ssub.s32 %s16, %s28
    %s100 = ssub.s32 %s17, %s24
    %s101 = sor.u32 %s99, %s100
    %p102 = scmp.eq.s32.totalorder %s101, 0
    %s104 = sadd.s32 %s103, 1
    %s105 = scalar_select %p102, %s103, %s104
    %p108 = pneg %p102
    %p109 = scmp.eq.s32.totalorder %s9, 1
    %p110 = por %p108, %p109
    %p111 = scmp.ne.s32.totalorder %s103, %s106
    %p112 = scmp.eq.s32.totalorder %s9, 0
    %p113 = por %p111, %p112
    %p114 = scmp.ne.s32.totalorder %s103, %s106
    %p115 = scmp.eq.s32.totalorder %s14, 1
    %p116 = por %p114, %p115
    %p117 = scmp.ne.s32.totalorder %s106, %s107
    %p118 = scmp.eq.s32.totalorder %s14, 0
    %p119 = por %p117, %p118
    %p120 = scmp.ne.s32.totalorder %s106, %s107
    %p121 = scmp.eq.s32.totalorder %s15, 1
    %p122 = por %p120, %p121
    %p124 = scmp.ne.s32.totalorder %s107, %s123
    %p125 = scmp.eq.s32.totalorder %s15, 0
    %p126 = por %p124, %p125
    %p127 = scmp.le.s32.totalorder 1, %s9
    %p128 = scmp.lt.s32.totalorder %s9, 3
    %p129 = pnand %p127, %p128
    %p130 = pneg %p129
    // Predicated region
    $region9: #{adaptive_conv.5} parent=5 // pred_check
      _
    $region10: #{adaptive_conv.5} parent=5 // pred_check_branch
      %132 = sbr.rel (%p129) target = $region12
    $region11: #{adaptive_conv.5} parent=5 // pred_region
      %s133 = ssub.s32 %s9, 1
      // Predicated region
      $region13: #{adaptive_conv.5} parent=11 // pred_check
        %p134 = pneg %p70
      $region14: #{adaptive_conv.5} parent=11 // pred_check_branch
        %136 = sbr.rel (%p134) target = $region16
      $region15: #{adaptive_conv.5} parent=11 // pred_region
        _
      $region16: #{adaptive_conv.5} parent=11 // pred_fallthru
        _
      // Predicated region
      $region17: #{adaptive_conv.5} parent=11 // pred_check
        %p137 = pneg %p91
      $region18: #{adaptive_conv.5} parent=11 // pred_check_branch
        %139 = sbr.rel (%p137) target = $region20
      $region19: #{adaptive_conv.5} parent=11 // pred_region
        _
      $region20: #{adaptive_conv.5} parent=11 // pred_fallthru
        _
    $region12: #{adaptive_conv.5} parent=5 // pred_fallthru
      _
    %p140 = scmp.lt.s32.totalorder %s9, 2
    // Predicated region
    $region21: #{adaptive_conv.5} parent=5 // pred_check
      %p141 = pneg %p140
    $region22: #{adaptive_conv.5} parent=5 // pred_check_branch
      %143 = sbr.rel (%p141) target = $region24
    $region23: #{adaptive_conv.5} parent=5 // pred_region
      // Predicated region
      $region25: #{adaptive_conv.5} parent=23 // pred_check
        %p144 = pneg %p43
      $region26: #{adaptive_conv.5} parent=23 // pred_check_branch
        %146 = sbr.rel (%p144) target = $region28
      $region27: #{adaptive_conv.5} parent=23 // pred_region
        %p147 = scmp.lt.s32.totalorder %s16, 1
        %s148 = scalar_select %p147, %s16, 1
        %p149 = scmp.lt.s32.totalorder %s17, 0
        %s150 = scalar_select %p149, %s17, 0
        %s151 = smul.addr %s148, 2
        %s152 = sadd.s32 %s150, %s151
        %s153 = smul.addr %s152, 8
        %s154 = scalar_lea.vmem %s0, %s153
      $region28: #{adaptive_conv.5} parent=23 // pred_fallthru
        _
    $region24: #{adaptive_conv.5} parent=5 // pred_fallthru
      _
    %p155 = scmp.le.s32.totalorder 1, %s9
    %p156 = scmp.lt.s32.totalorder %s9, 3
    %p157 = pnand %p155, %p156
    %p158 = pneg %p157
    // Predicated region
    $region29: #{adaptive_conv.5} parent=5 // pred_check
      _
    $region30: #{adaptive_conv.5} parent=5 // pred_check_branch
      %160 = sbr.rel (%p157) target = $region32
    $region31: #{adaptive_conv.5} parent=5 // pred_region
      %s161 = ssub.s32 %s9, 1
      %p162 = scmp.lt.s32.totalorder %s18, 1
      %s163 = scalar_select %p162, %s18, 1
      %p164 = scmp.lt.s32.totalorder %s19, 0
      %s165 = scalar_select %p164, %s19, 0
      %s166 = smul.addr %s163, 2
      %s167 = sadd.s32 %s165, %s166
      %s168 = smul.addr %s167, 8
      %s169 = scalar_lea.vmem %s0, %s168
      %p170 = pneg %p49
      %p171 = pneg %p46
      %p172 = pneg %p70
      %p173 = pneg %p67
      %p174 = pneg %p91
      %p175 = pneg %p88
      %p176 = pneg %p119
      %p177 = pneg %p116
      %p178 = scmp.lt.s32.totalorder %s18, 1
      %s179 = scalar_select %p178, %s18, 1
      %p180 = scmp.lt.s32.totalorder %s19, 0
      %s181 = scalar_select %p180, %s19, 0
      %s182 = smul.addr %s179, 2
      %s183 = sadd.s32 %s181, %s182
      %s184 = smul.addr %s183, 8
      %s185 = scalar_lea.vmem %s3, %s184
      %p186 = scmp.lt.s32.totalorder %s18, 1
      %s187 = scalar_select %p186, %s18, 1
      %p188 = scmp.lt.s32.totalorder %s19, 0
      %s189 = scalar_select %p188, %s19, 0
      %s190 = smul.addr %s187, 2
      %s191 = sadd.s32 %s189, %s190
      %s192 = smul.addr %s191, 8
      %s193 = scalar_lea.vmem %s0, %s192
      %p194 = scmp.lt.s32.totalorder %s18, 1
      %s195 = scalar_select %p194, %s18, 1
      %p196 = scmp.lt.s32.totalorder %s19, 0
      %s197 = scalar_select %p196, %s19, 0
      %s198 = smul.addr %s195, 2
      %s199 = sadd.s32 %s197, %s198
      %s200 = smul.addr %s199, 8
      %s201 = scalar_lea.vmem %s3, %s200
      %v202 = vld [vmem:[%s193] sm:$0xff]
      %v203 = vld [vmem:[%s193 + $0x8] sm:$0xff]
      %v204 = vld [vmem:[%s1] sm:$0xff]
      %v205 = vld [vmem:[%s1 + $0x8] sm:$0xff]
      %207 = vset.pattern.permute.xlu0 0
      %208 = vperm.xlu0 %207, %v204
      %v209 = vpop.permute.xlu0 %208
      %212 = vset.pattern.permute.xlu0 0
      %213 = vperm.xlu0 %212, %v205
      %v214 = vpop.permute.xlu0 %213
      %v216 = vmul.f32 %v202, %v209
      %v217 = vmul.f32 %v203, %v214
      %v218 = vld [vmem:[%s2] sm:$0xff]
      %v219 = vld [vmem:[%s2 + $0x8] sm:$0xff]
      %221 = vset.pattern.permute.xlu0 0
      %222 = vperm.xlu0 %221, %v218
      %v223 = vpop.permute.xlu0 %222
      %226 = vset.pattern.permute.xlu0 0
      %227 = vperm.xlu0 %226, %v219
      %v228 = vpop.permute.xlu0 %227
      %v230 = vadd.f32 %v216, %v223
      %v231 = vadd.f32 %v217, %v228
      %vm232 = vcmp.gt.f32.partialorder %v230, 0.0
      %vm233 = vcmp.gt.f32.partialorder %v231, 0.0
      %v234 = vmul.f32 %v230, 0.2
      %v235 = vmul.f32 %v231, 0.2
      %v236 = vsel %vm232, %v230, %v234
      %v237 = vsel %vm233, %v231, %v235
      %238 = vst [vmem:[%s201] sm:$0xff] %v236
      %239 = vst [vmem:[%s201 + $0x8] sm:$0xff] %v237
      %p240 = scmp.lt.s32.totalorder %s18, 1
      %s241 = scalar_select %p240, %s18, 1
      %p242 = scmp.lt.s32.totalorder %s19, 0
      %s243 = scalar_select %p242, %s19, 0
      %s244 = smul.addr %s241, 2
      %s245 = sadd.s32 %s243, %s244
      %s246 = smul.addr %s245, 8
      %s247 = scalar_lea.vmem %s3, %s246
      // Predicated region
      $region33: #{adaptive_conv.5} parent=31 // pred_check
        %p248 = pneg %p116
      $region34: #{adaptive_conv.5} parent=31 // pred_check_branch
        %250 = sbr.rel (%p248) target = $region36
      $region35: #{adaptive_conv.5} parent=31 // pred_region
        _
      $region36: #{adaptive_conv.5} parent=31 // pred_fallthru
        _
    $region32: #{adaptive_conv.5} parent=5 // pred_fallthru
      _
    %p251 = scmp.le.s32.totalorder 2, %s9
    // Predicated region
    $region37: #{adaptive_conv.5} parent=5 // pred_check
      %p252 = pneg %p251
    $region38: #{adaptive_conv.5} parent=5 // pred_check_branch
      %254 = sbr.rel (%p252) target = $region40
    $region39: #{adaptive_conv.5} parent=5 // pred_region
      %s255 = ssub.s32 %s9, 2
      // Predicated region
      $region41: #{adaptive_conv.5} parent=39 // pred_check
        %p256 = pneg %p122
      $region42: #{adaptive_conv.5} parent=39 // pred_check_branch
        %258 = sbr.rel (%p256) target = $region44
      $region43: #{adaptive_conv.5} parent=39 // pred_region
        %p259 = scmp.lt.s32.totalorder %s20, 1
        %s260 = scalar_select %p259, %s20, 1
        %p261 = scmp.lt.s32.totalorder %s21, 0
        %s262 = scalar_select %p261, %s21, 0
        %s263 = smul.addr %s260, 2
        %s264 = sadd.s32 %s262, %s263
        %s265 = smul.addr %s264, 8
        %s266 = scalar_lea.vmem %s3, %s265
      $region44: #{adaptive_conv.5} parent=39 // pred_fallthru
        _
    $region40: #{adaptive_conv.5} parent=5 // pred_fallthru
      _
  $region6: #{adaptive_conv.5} parent=0 // loop_footer
    %s13 = sadd.s32 1, %s9
  $region7: #{adaptive_conv.5} parent=0 // loop_footer_branch
    %8 = sbr.rel target = $region3
  $region8: #{adaptive_conv.5} parent=0 // loop_exit
    _

// kernel: adaptive_conv.3
$region0: #{adaptive_conv.3}
  #allocation0 [shape = 'u32[]', space=smem, size = 0x4, offset = 0x4, fixed_abs, tag = 'smem constant byte address 0x4 - core index']
  #allocation1 [shape = 'u32[72,128]{1,0:T(1,128)}', space=vmem, size = 0x9000, scoped, tag = 'internal scratch']
  %s0 = inlined_call_operand.vmem [shape: bf16[2,32,128], index: 0, kind: input, shape index: {}]
  %s1 = inlined_call_operand.vmem [shape: f32[16,32], index: 1, kind: input, shape index: {}]
  %s2 = inlined_call_operand.vmem [shape: f32[2,1,16,2], index: 2, kind: output, shape index: {}]
  %s3 = sld [smem:[#allocation0]]
  $region41: #{adaptive_conv.3} parent=0
    _
  %s5 = ssub.s32 1, %s3
  %s6 = scalar_select 0, %s5, %s3
  loop: start=0, step=1, limit=4
  $region2: #{adaptive_conv.3} parent=0 // loop_pre_header
    _
  $region3: #{adaptive_conv.3} parent=0 // loop_header
    %s8 = sphi 0, %s12
    %p9 = scmp.ge.s32.totalorder %s8, 4
    %s15 = sphi 0, %s27
    %s16 = sphi 0, %s23
    %s17 = sphi 0, %s15
    %s18 = sphi 0, %s16
    %s19 = sphi 0, %s17
    %s20 = sphi 0, %s18
    %s32 = sphi 0, %s34
    %s35 = sphi 0, %s32
    %s36 = sphi 0, %s35
    %s52 = sphi 0, %s36
    %s56 = sphi 0, %s56
    %s58 = sphi 0, %s56
    %s59 = sphi 0, %s58
    %s73 = sphi 0, %s59
    %s81 = sphi 0, %s83
    %s84 = sphi 0, %s81
    %s85 = sphi 0, %s84
    %s101 = sphi 0, %s85
  $region4: #{adaptive_conv.3} parent=0 // loop_header_branch
    %11 = sbr.rel (%p9) target = $region8
  $region5: #{adaptive_conv.3} parent=0 // loop_body
    %s13 = ssub.s32 %s8, 1
    %s14 = ssub.s32 %s8, 2
    %s21 = sadd.s32 1, %s16
    %p22 = scmp.ge.s32.totalorder %s21, 1
    %s23 = scalar_select %p22, 0, %s21
    %s24 = sadd.s32 1, %s15
    %s25 = scalar_select %p22, %s24, %s15
    %p26 = scmp.ge.s32.totalorder %s25, 2
    %s27 = scalar_select %p26, 0, %s25
    %s28 = ssub.s32 %s15, %s27
    %s29 = ssub.s32 %s16, %s23
    %s30 = sor.u32 %s28, %s29
    %p31 = scmp.eq.s32.totalorder %s30, 0
    %s33 = sadd.s32 %s32, 1
    %s34 = scalar_select %p31, %s32, %s33
    %p37 = pneg %p31
    %p38 = scmp.eq.s32.totalorder %s8, 1
    %p39 = por %p37, %p38
    %p40 = scmp.ne.s32.totalorder %s32, %s35
    %p41 = scmp.eq.s32.totalorder %s8, 0
    %p42 = por %p40, %p41
    %p43 = scmp.ne.s32.totalorder %s32, %s35
    %p44 = scmp.eq.s32.totalorder %s13, 1
    %p45 = por %p43, %p44
    %p46 = scmp.ne.s32.totalorder %s35, %s36
    %p47 = scmp.eq.s32.totalorder %s13, 0
    %p48 = por %p46, %p47
    %p49 = scmp.ne.s32.totalorder %s35, %s36
    %p50 = scmp.eq.s32.totalorder %s14, 1
    %p51 = por %p49, %p50
    %p53 = scmp.ne.s32.totalorder %s36, %s52
    %p54 = scmp.eq.s32.totalorder %s14, 0
    %p55 = por %p53, %p54
    %s57 = sadd.s32 %s56, 1
    %p60 = scmp.eq.s32.totalorder %s8, 1
    %p61 = scmp.ne.s32.totalorder %s56, %s58
    %p62 = scmp.eq.s32.totalorder %s8, 0
    %p63 = por %p61, %p62
    %p64 = scmp.ne.s32.totalorder %s56, %s58
    %p65 = scmp.eq.s32.totalorder %s13, 1
    %p66 = por %p64, %p65
    %p67 = scmp.ne.s32.totalorder %s58, %s59
    %p68 = scmp.eq.s32.totalorder %s13, 0
    %p69 = por %p67, %p68
    %p70 = scmp.ne.s32.totalorder %s58, %s59
    %p71 = scmp.eq.s32.totalorder %s14, 1
    %p72 = por %p70, %p71
    %p74 = scmp.ne.s32.totalorder %s59, %s73
    %p75 = scmp.eq.s32.totalorder %s14, 0
    %p76 = por %p74, %p75
    %s77 = ssub.s32 %s15, %s27
    %s78 = ssub.s32 %s16, %s23
    %s79 = sor.u32 %s77, %s78
    %p80 = scmp.eq.s32.totalorder %s79, 0
    %s82 = sadd.s32 %s81, 1
    %s83 = scalar_select %p80, %s81, %s82
    %p86 = pneg %p80
    %p87 = scmp.eq.s32.totalorder %s8, 1
    %p88 = por %p86, %p87
    %p89 = scmp.ne.s32.totalorder %s81, %s84
    %p90 = scmp.eq.s32.totalorder %s8, 0
    %p91 = por %p89, %p90
    %p92 = scmp.ne.s32.totalorder %s81, %s84
    %p93 = scmp.eq.s32.totalorder %s13, 1
    %p94 = por %p92, %p93
    %p95 = scmp.ne.s32.totalorder %s84, %s85
    %p96 = scmp.eq.s32.totalorder %s13, 0
    %p97 = por %p95, %p96
    %p98 = scmp.ne.s32.totalorder %s84, %s85
    %p99 = scmp.eq.s32.totalorder %s14, 1
    %p100 = por %p98, %p99
    %p102 = scmp.ne.s32.totalorder %s85, %s101
    %p103 = scmp.eq.s32.totalorder %s14, 0
    %p104 = por %p102, %p103
    %p105 = scmp.le.s32.totalorder 1, %s8
    %p106 = scmp.lt.s32.totalorder %s8, 3
    %p107 = pnand %p105, %p106
    %p108 = pneg %p107
    // Predicated region
    $region9: #{adaptive_conv.3} parent=5 // pred_check
      _
    $region10: #{adaptive_conv.3} parent=5 // pred_check_branch
      %110 = sbr.rel (%p107) target = $region12
    $region11: #{adaptive_conv.3} parent=5 // pred_region
      %s111 = ssub.s32 %s8, 1
      // Predicated region
      $region13: #{adaptive_conv.3} parent=11 // pred_check
        %p112 = pneg %p69
      $region14: #{adaptive_conv.3} parent=11 // pred_check_branch
        %114 = sbr.rel (%p112) target = $region16
      $region15: #{adaptive_conv.3} parent=11 // pred_region
        _
      $region16: #{adaptive_conv.3} parent=11 // pred_fallthru
        _
    $region12: #{adaptive_conv.3} parent=5 // pred_fallthru
      _
    %p115 = scmp.lt.s32.totalorder %s8, 2
    // Predicated region
    $region17: #{adaptive_conv.3} parent=5 // pred_check
      %p116 = pneg %p115
    $region18: #{adaptive_conv.3} parent=5 // pred_check_branch
      %118 = sbr.rel (%p116) target = $region20
    $region19: #{adaptive_conv.3} parent=5 // pred_region
      // Predicated region
      $region21: #{adaptive_conv.3} parent=19 // pred_check
        %p119 = pneg %p42
      $region22: #{adaptive_conv.3} parent=19 // pred_check_branch
        %121 = sbr.rel (%p119) target = $region24
      $region23: #{adaptive_conv.3} parent=19 // pred_region
        %p122 = scmp.lt.s32.totalorder %s15, 1
        %s123 = scalar_select %p122, %s15, 1
        %p124 = scmp.lt.s32.totalorder %s16, 0
        %s125 = scalar_select %p124, %s16, 0
        %s126 = smul.addr %s123, 4
        %s127 = sadd.s32 %s125, %s126
        %s128 = smul.addr %s127, 4
        %s129 = scalar_lea.vmem %s0, %s128
      $region24: #{adaptive_conv.3} parent=19 // pred_fallthru
        _
    $region20: #{adaptive_conv.3} parent=5 // pred_fallthru
      _
    %p130 = scmp.le.s32.totalorder 1, %s8
    %p131 = scmp.lt.s32.totalorder %s8, 3
    %p132 = pnand %p130, %p131
    %p133 = pneg %p132
    // Predicated region
    $region25: #{adaptive_conv.3} parent=5 // pred_check
      _
    $region26: #{adaptive_conv.3} parent=5 // pred_check_branch
      %135 = sbr.rel (%p132) target = $region28
    $region27: #{adaptive_conv.3} parent=5 // pred_region
      %s136 = ssub.s32 %s8, 1
      %p137 = scmp.lt.s32.totalorder %s17, 1
      %s138 = scalar_select %p137, %s17, 1
      %p139 = scmp.lt.s32.totalorder %s18, 0
      %s140 = scalar_select %p139, %s18, 0
      %s141 = smul.addr %s138, 4
      %s142 = sadd.s32 %s140, %s141
      %s143 = smul.addr %s142, 4
      %s144 = scalar_lea.vmem %s0, %s143
      %p145 = pneg %p48
      %p146 = pneg %p45
      %p147 = pneg %p69
      %p148 = pneg %p66
      %p149 = pneg %p97
      %p150 = pneg %p94
      %p151 = scmp.lt.s32.totalorder %s17, 1
      %s152 = scalar_select %p151, %s17, 1
      %p153 = scmp.lt.s32.totalorder %s18, 0
      %s154 = scalar_select %p153, %s18, 0
      %s155 = smul.addr %s154, 2
      %s156 = smul.addr %s152, 2
      %s157 = sadd.s32 %s155, %s156
      %s158 = smul.addr %s157, 8
      %s159 = scalar_lea.vmem %s2, %s158
      %p160 = scmp.lt.s32.totalorder %s17, 1
      %s161 = scalar_select %p160, %s17, 1
      %p162 = scmp.lt.s32.totalorder %s18, 0
      %s163 = scalar_select %p162, %s18, 0
      %s164 = smul.addr %s161, 4
      %s165 = sadd.s32 %s163, %s164
      %s166 = smul.addr %s165, 4
      %s167 = scalar_lea.vmem %s0, %s166
      %p168 = scmp.lt.s32.totalorder %s17, 1
      %s169 = scalar_select %p168, %s17, 1
      %p170 = scmp.lt.s32.totalorder %s18, 0
      %s171 = scalar_select %p170, %s18, 0
      %s172 = smul.addr %s171, 2
      %s173 = smul.addr %s169, 2
      %s174 = sadd.s32 %s172, %s173
      %s175 = smul.addr %s174, 8
      %s176 = scalar_lea.vmem %s2, %s175
      %v177 = vld [vmem:[%s1] sm:$0xff]
      %v178 = vld [vmem:[%s1 + $0x8] sm:$0xff]
      %v179 = vld [vmem:[%s167] sm:$0xf]
      %v180 = vld [vmem:[%s167 + $0x4] sm:$0xf]
      %v181 = vld [vmem:[%s167 + $0x8] sm:$0xf]
      %v182 = vld [vmem:[%s167 + $0xc] sm:$0xf]
      %v183 = vunpack.c.l.bf16 %v179
      %v184 = vunpack.c.l.bf16 %v180
      %v185 = vunpack.c.l.bf16 %v181
      %v186 = vunpack.c.l.bf16 %v182
      %vm187 = vcmask 261120
      %v189 = vsel %vm187, %v177, 0
      %v192 = vsel %vm187, %v178, 0
      %194 = vmatpush.msra.mxu0 0.0
      %195 = vmatpush.msra.mxu0 0.0
      %196 = vmatpush.msra.mxu0 0.0
      %197 = vmatpush.msra.mxu0 0.0
      %198 = vmatpush.msra.mxu0 0.0
      %199 = vmatpush.msra.mxu0 0.0
      %200 = vmatpush.msra.mxu0 0.0
      %201 = vmatpush.msra.mxu0 0.0
      %202 = vmatpush.msra.mxu0 0.0
      %203 = vmatpush.msra.mxu0 0.0
      %204 = vmatpush.msra.mxu0 0.0
      %205 = vmatpush.msra.mxu0 0.0
      %206 = vmatpush.msra.mxu0 %v186
      %207 = vmatpush.msra.mxu0 %v185
      %208 = vmatpush.msra.mxu0 %v184
      %209 = vmatpush.msra.mxu0 %v183
      %210 = vmatmul.f32.gmra.mxu0 %v189
      %v211 = vpop.f32.mrf.mxu0
      %v212 = vadd.f32 0.0, %v211
      %213 = vmatmul.f32.gmra.mxu0 %v192
      %v214 = vpop.f32.mrf.mxu0
      %v215 = vadd.f32 0.0, %v214
      %216 = vdwg.mxu0
      %217 = vadd.xlane.f32.xlu0 %v212
      %v218 = vpop.xlane.xlu0 %217
      %219 = vadd.xlane.f32.xlu0 %v215
      %v220 = vpop.xlane.xlu0 %219
      %v221 = vrcp.pop 128.0
      %v222 = vmul.f32 128.0, %v221
      %v223 = vsub.f32 1.0, %v222
      %v224 = vmul.f32 %v221, %v223
      %v225 = vadd.f32 %v221, %v224
      %vm226 = vweird.f32 %v221
      %v227 = vsel %vm226, %v221, %v225
      %v228 = vmul.f32 %v218, %v227
      %v229 = vmul.f32 %v220, %v227
      %v230 = vsub.f32 %v212, %v228
      %v231 = vsub.f32 %v215, %v229
      %v232 = vmul.f32 %v230, %v230
      %v233 = vmul.f32 %v231, %v231
      %234 = vadd.xlane.f32.xlu0 %v232
      %v235 = vpop.xlane.xlu0 %234
      %236 = vadd.xlane.f32.xlu0 %v233
      %v237 = vpop.xlane.xlu0 %236
      %vm238 = vcmask 7168
      %v239 = vsel %vm238, %v218, %v235
      %v240 = vsel %vm238, %v220, %v237
      %vm241 = vcmask 15360
      %242 = vst.msk [vmem:[%s176] sm:$0xff] %vm241, %v239
      %243 = vst.msk [vmem:[%s176 + $0x8] sm:$0xff] %vm241, %v240
      %p244 = scmp.lt.s32.totalorder %s17, 1
      %s245 = scalar_select %p244, %s17, 1
      %p246 = scmp.lt.s32.totalorder %s18, 0
      %s247 = scalar_select %p246, %s18, 0
      %s248 = smul.addr %s247, 2
      %s249 = smul.addr %s245, 2
      %s250 = sadd.s32 %s248, %s249
      %s251 = smul.addr %s250, 8
      %s252 = scalar_lea.vmem %s2, %s251
      // Predicated region
      $region29: #{adaptive_conv.3} parent=27 // pred_check
        %p253 = pneg %p94
      $region30: #{adaptive_conv.3} parent=27 // pred_check_branch
        %255 = sbr.rel (%p253) target = $region32
      $region31: #{adaptive_conv.3} parent=27 // pred_region
        _
      $region32: #{adaptive_conv.3} parent=27 // pred_fallthru
        _
    $region28: #{adaptive_conv.3} parent=5 // pred_fallthru
      _
    %p256 = scmp.le.s32.totalorder 2, %s8
    // Predicated region
    $region33: #{adaptive_conv.3} parent=5 // pred_check
      %p257 = pneg %p256
    $region34: #{adaptive_conv.3} parent=5 // pred_check_branch
      %259 = sbr.rel (%p257) target = $region36
    $region35: #{adaptive_conv.3} parent=5 // pred_region
      %s260 = ssub.s32 %s8, 2
      // Predicated region
      $region37: #{adaptive_conv.3} parent=35 // pred_check
        %p261 = pneg %p100
      $region38: #{adaptive_conv.3} parent=35 // pred_check_branch
        %263 = sbr.rel (%p261) target = $region40
      $region39: #{adaptive_conv.3} parent=35 // pred_region
        %p264 = scmp.lt.s32.totalorder %s19, 1
        %s265 = scalar_select %p264, %s19, 1
        %p266 = scmp.lt.s32.totalorder %s20, 0
        %s267 = scalar_select %p266, %s20, 0
        %s268 = smul.addr %s267, 2
        %s269 = smul.addr %s265, 2
        %s270 = sadd.s32 %s268, %s269
        %s271 = smul.addr %s270, 8
        %s272 = scalar_lea.vmem %s2, %s271
      $region40: #{adaptive_conv.3} parent=35 // pred_fallthru
        _
    $region36: #{adaptive_conv.3} parent=5 // pred_fallthru
      _
  $region6: #{adaptive_conv.3} parent=0 // loop_footer
    %s12 = sadd.s32 1, %s8
  $region7: #{adaptive_conv.3} parent=0 // loop_footer_branch
    %7 = sbr.rel target = $region3
  $region8: #{adaptive_conv.3} parent=0 // loop_exit
    _

// kernel: adaptive_conv.4
$region0: #{adaptive_conv.4}
  #allocation0 [shape = 'u32[]', space=smem, size = 0x4, offset = 0x4, fixed_abs, tag = 'smem constant byte address 0x4 - core index']
  #allocation1 [shape = 'u32[72,128]{1,0:T(1,128)}', space=vmem, size = 0x9000, scoped, tag = 'internal scratch']
  %s0 = inlined_call_operand.vmem [shape: bf16[2,4,128], index: 0, kind: input, shape index: {}]
  %s1 = inlined_call_operand.vmem [shape: bf16[2,32,128], index: 1, kind: input, shape index: {}]
  %s2 = inlined_call_operand.vmem [shape: f32[16,32], index: 2, kind: input, shape index: {}]
  %s3 = inlined_call_operand.vmem [shape: f32[4,16,16], index: 3, kind: input, shape index: {}]
  %s4 = inlined_call_operand.vmem [shape: f32[16,1], index: 4, kind: input, shape index: {}]
  %s5 = inlined_call_operand.vmem [shape: f32[16,1], index: 5, kind: input, shape index: {}]
  %s6 = inlined_call_operand.vmem [shape: f32[2,16,128], index: 6, kind: output, shape index: {0}]
  %s7 = inlined_call_operand.vmem [shape: f32[2,1,16,2], index: 7, kind: output, shape index: {1}]
  %8 = xla_tuple %s6, %s7
  %s9 = sld [smem:[#allocation0]]
  $region65: #{adaptive_conv.4} parent=0
    _
  %s11 = ssub.s32 1, %s9
  %s12 = scalar_select 0, %s11, %s9
  loop: start=0, step=1, limit=4
  $region2: #{adaptive_conv.4} parent=0 // loop_pre_header
    _
  $region3: #{adaptive_conv.4} parent=0 // loop_header
    %s14 = sphi 0, %s18
    %p15 = scmp.ge.s32.totalorder %s14, 4
    %s21 = sphi 0, %s33
    %s22 = sphi 0, %s29
    %s23 = sphi 0, %s21
    %s24 = sphi 0, %s22
    %s25 = sphi 0, %s23
    %s26 = sphi 0, %s24
    %s38 = sphi 0, %s40
    %s41 = sphi 0, %s38
    %s42 = sphi 0, %s41
    %s58 = sphi 0, %s42
    %s66 = sphi 0, %s68
    %s69 = sphi 0, %s66
    %s70 = sphi 0, %s69
    %s86 = sphi 0, %s70
    %s90 = sphi 0, %s90
    %s92 = sphi 0, %s90
    %s93 = sphi 0, %s92
    %s107 = sphi 0, %s93
    %s111 = sphi 0, %s111
    %s113 = sphi 0, %s111
    %s114 = sphi 0, %s113
    %s128 = sphi 0, %s114
    %s132 = sphi 0, %s132
    %s134 = sphi 0, %s132
    %s135 = sphi 0, %s134
    %s149 = sphi 0, %s135
    %s153 = sphi 0, %s153
    %s155 = sphi 0, %s153
    %s156 = sphi 0, %s155
    %s170 = sphi 0, %s156
    %s178 = sphi 0, %s180
    %s181 = sphi 0, %s178
    %s182 = sphi 0, %s181
    %s198 = sphi 0, %s182
    %s206 = sphi 0, %s208
    %s209 = sphi 0, %s206
    %s210 = sphi 0, %s209
    %s226 = sphi 0, %s210
  $region4: #{adaptive_conv.4} parent=0 // loop_header_branch
    %17 = sbr.rel (%p15) target = $region8
  $region5: #{adaptive_conv.4} parent=0 // loop_body
    %s19 = ssub.s32 %s14, 1
    %s20 = ssub.s32 %s14, 2
    %s27 = sadd.s32 1, %s22
    %p28 = scmp.ge.s32.totalorder %s27, 1
    %s29 = scalar_select %p28, 0, %s27
    %s30 = sadd.s32 1, %s21
    %s31 = scalar_select %p28, %s30, %s21
    %p32 = scmp.ge.s32.totalorder %s31, 2
    %s33 = scalar_select %p32, 0, %s31
    %s34 = ssub.s32 %s21, %s33
    %s35 = ssub.s32 %s22, %s29
    %s36 = sor.u32 %s34, %s35
    %p37 = scmp.eq.s32.totalorder %s36, 0
    %s39 = sadd.s32 %s38, 1
    %s40 = scalar_select %p37, %s38, %s39
    %p43 = pneg %p37
    %p44 = scmp.eq.s32.totalorder %s14, 1
    %p45 = por %p43, %p44
    %p46 = scmp.ne.s32.totalorder %s38, %s41
    %p47 = scmp.eq.s32.totalorder %s14, 0
    %p48 = por %p46, %p47
    %p49 = scmp.ne.s32.totalorder %s38, %s41
    %p50 = scmp.eq.s32.totalorder %s19, 1
    %p51 = por %p49, %p50
    %p52 = scmp.ne.s32.totalorder %s41, %s42
    %p53 = scmp.eq.s32.totalorder %s19, 0
    %p54 = por %p52, %p53
    %p55 = scmp.ne.s32.totalorder %s41, %s42
    %p56 = scmp.eq.s32.totalorder %s20, 1
    %p57 = por %p55, %p56
    %p59 = scmp.ne.s32.totalorder %s42, %s58
    %p60 = scmp.eq.s32.totalorder %s20, 0
    %p61 = por %p59, %p60
    %s62 = ssub.s32 %s21, %s33
    %s63 = ssub.s32 %s22, %s29
    %s64 = sor.u32 %s62, %s63
    %p65 = scmp.eq.s32.totalorder %s64, 0
    %s67 = sadd.s32 %s66, 1
    %s68 = scalar_select %p65, %s66, %s67
    %p71 = pneg %p65
    %p72 = scmp.eq.s32.totalorder %s14, 1
    %p73 = por %p71, %p72
    %p74 = scmp.ne.s32.totalorder %s66, %s69
    %p75 = scmp.eq.s32.totalorder %s14, 0
    %p76 = por %p74, %p75
    %p77 = scmp.ne.s32.totalorder %s66, %s69
    %p78 = scmp.eq.s32.totalorder %s19, 1
    %p79 = por %p77, %p78
    %p80 = scmp.ne.s32.totalorder %s69, %s70
    %p81 = scmp.eq.s32.totalorder %s19, 0
    %p82 = por %p80, %p81
    %p83 = scmp.ne.s32.totalorder %s69, %s70
    %p84 = scmp.eq.s32.totalorder %s20, 1
    %p85 = por %p83, %p84
    %p87 = scmp.ne.s32.totalorder %s70, %s86
    %p88 = scmp.eq.s32.totalorder %s20, 0
    %p89 = por %p87, %p88
    %s91 = sadd.s32 %s90, 1
    %p94 = scmp.eq.s32.totalorder %s14, 1
    %p95 = scmp.ne.s32.totalorder %s90, %s92
    %p96 = scmp.eq.s32.totalorder %s14, 0
    %p97 = por %p95, %p96
    %p98 = scmp.ne.s32.totalorder %s90, %s92
    %p99 = scmp.eq.s32.totalorder %s19, 1
    %p100 = por %p98, %p99
    %p101 = scmp.ne.s32.totalorder %s92, %s93
    %p102 = scmp.eq.s32.totalorder %s19, 0
    %p103 = por %p101, %p102
    %p104 = scmp.ne.s32.totalorder %s92, %s93
    %p105 = scmp.eq.s32.totalorder %s20, 1
    %p106 = por %p104, %p105
    %p108 = scmp.ne.s32.totalorder %s93, %s107
    %p109 = scmp.eq.s32.totalorder %s20, 0
    %p110 = por %p108, %p109
    %s112 = sadd.s32 %s111, 1
    %p115 = scmp.eq.s32.totalorder %s14, 1
    %p116 = scmp.ne.s32.totalorder %s111, %s113
    %p117 = scmp.eq.s32.totalorder %s14, 0
    %p118 = por %p116, %p117
    %p119 = scmp.ne.s32.totalorder %s111, %s113
    %p120 = scmp.eq.s32.totalorder %s19, 1
    %p121 = por %p119, %p120
    %p122 = scmp.ne.s32.totalorder %s113, %s114
    %p123 = scmp.eq.s32.totalorder %s19, 0
    %p124 = por %p122, %p123
    %p125 = scmp.ne.s32.totalorder %s113, %s114
    %p126 = scmp.eq.s32.totalorder %s20, 1
    %p127 = por %p125, %p126
    %p129 = scmp.ne.s32.totalorder %s114, %s128
    %p130 = scmp.eq.s32.totalorder %s20, 0
    %p131 = por %p129, %p130
    %s133 = sadd.s32 %s132, 1
    %p136 = scmp.eq.s32.totalorder %s14, 1
    %p137 = scmp.ne.s32.totalorder %s132, %s134
    %p138 = scmp.eq.s32.totalorder %s14, 0
    %p139 = por %p137, %p138
    %p140 = scmp.ne.s32.totalorder %s132, %s134
    %p141 = scmp.eq.s32.totalorder %s19, 1
    %p142 = por %p140, %p141
    %p143 = scmp.ne.s32.totalorder %s134, %s135
    %p144 = scmp.eq.s32.totalorder %s19, 0
    %p145 = por %p143, %p144
    %p146 = scmp.ne.s32.totalorder %s134, %s135
    %p147 = scmp.eq.s32.totalorder %s20, 1
    %p148 = por %p146, %p147
    %p150 = scmp.ne.s32.totalorder %s135, %s149
    %p151 = scmp.eq.s32.totalorder %s20, 0
    %p152 = por %p150, %p151
    %s154 = sadd.s32 %s153, 1
    %p157 = scmp.eq.s32.totalorder %s14, 1
    %p158 = scmp.ne.s32.totalorder %s153, %s155
    %p159 = scmp.eq.s32.totalorder %s14, 0
    %p160 = por %p158, %p159
    %p161 = scmp.ne.s32.totalorder %s153, %s155
    %p162 = scmp.eq.s32.totalorder %s19, 1
    %p163 = por %p161, %p162
    %p164 = scmp.ne.s32.totalorder %s155, %s156
    %p165 = scmp.eq.s32.totalorder %s19, 0
    %p166 = por %p164, %p165
    %p167 = scmp.ne.s32.totalorder %s155, %s156
    %p168 = scmp.eq.s32.totalorder %s20, 1
    %p169 = por %p167, %p168
    %p171 = scmp.ne.s32.totalorder %s156, %s170
    %p172 = scmp.eq.s32.totalorder %s20, 0
    %p173 = por %p171, %p172
    %s174 = ssub.s32 %s21, %s33
    %s175 = ssub.s32 %s22, %s29
    %s176 = sor.u32 %s174, %s175
    %p177 = scmp.eq.s32.totalorder %s176, 0
    %s179 = sadd.s32 %s178, 1
    %s180 = scalar_select %p177, %s178, %s179
    %p183 = pneg %p177
    %p184 = scmp.eq.s32.totalorder %s14, 1
    %p185 = por %p183, %p184
    %p186 = scmp.ne.s32.totalorder %s178, %s181
    %p187 = scmp.eq.s32.totalorder %s14, 0
    %p188 = por %p186, %p187
    %p189 = scmp.ne.s32.totalorder %s178, %s181
    %p190 = scmp.eq.s32.totalorder %s19, 1
    %p191 = por %p189, %p190
    %p192 = scmp.ne.s32.totalorder %s181, %s182
    %p193 = scmp.eq.s32.totalorder %s19, 0
    %p194 = por %p192, %p193
    %p195 = scmp.ne.s32.totalorder %s181, %s182
    %p196 = scmp.eq.s32.totalorder %s20, 1
    %p197 = por %p195, %p196
    %p199 = scmp.ne.s32.totalorder %s182, %s198
    %p200 = scmp.eq.s32.totalorder %s20, 0
    %p201 = por %p199, %p200
    %s202 = ssub.s32 %s21, %s33
    %s203 = ssub.s32 %s22, %s29
    %s204 = sor.u32 %s202, %s203
    %p205 = scmp.eq.s32.totalorder %s204, 0
    %s207 = sadd.s32 %s206, 1
    %s208 = scalar_select %p205, %s206, %s207
    %p211 = pneg %p205
    %p212 = scmp.eq.s32.totalorder %s14, 1
    %p213 = por %p211, %p212
    %p214 = scmp.ne.s32.totalorder %s206, %s209
    %p215 = scmp.eq.s32.totalorder %s14, 0
    %p216 = por %p214, %p215
    %p217 = scmp.ne.s32.totalorder %s206, %s209
    %p218 = scmp.eq.s32.totalorder %s19, 1
    %p219 = por %p217, %p218
    %p220 = scmp.ne.s32.totalorder %s209, %s210
    %p221 = scmp.eq.s32.totalorder %s19, 0
    %p222 = por %p220, %p221
    %p223 = scmp.ne.s32.totalorder %s209, %s210
    %p224 = scmp.eq.s32.totalorder %s20, 1
    %p225 = por %p223, %p224
    %p227 = scmp.ne.s32.totalorder %s210, %s226
    %p228 = scmp.eq.s32.totalorder %s20, 0
    %p229 = por %p227, %p228
    %p230 = scmp.le.s32.totalorder 1, %s14
    %p231 = scmp.lt.s32.totalorder %s14, 3
    %p232 = pnand %p230, %p231
    %p233 = pneg %p232
    // Predicated region
    $region9: #{adaptive_conv.4} parent=5 // pred_check
      _
    $region10: #{adaptive_conv.4} parent=5 // pred_check_branch
      %235 = sbr.rel (%p232) target = $region12
    $region11: #{adaptive_conv.4} parent=5 // pred_region
      %s236 = ssub.s32 %s14, 1
      // Predicated region
      $region13: #{adaptive_conv.4} parent=11 // pred_check
        %p237 = pneg %p103
      $region14: #{adaptive_conv.4} parent=11 // pred_check_branch
        %239 = sbr.rel (%p237) target = $region16
      $region15: #{adaptive_conv.4} parent=11 // pred_region
        _
      $region16: #{adaptive_conv.4} parent=11 // pred_fallthru
        _
      // Predicated region
      $region17: #{adaptive_conv.4} parent=11 // pred_check
        %p240 = pneg %p124
      $region18: #{adaptive_conv.4} parent=11 // pred_check_branch
        %242 = sbr.rel (%p240) target = $region20
      $region19: #{adaptive_conv.4} parent=11 // pred_region
        _
      $region20: #{adaptive_conv.4} parent=11 // pred_fallthru
        _
      // Predicated region
      $region21: #{adaptive_conv.4} parent=11 // pred_check
        %p243 = pneg %p145
      $region22: #{adaptive_conv.4} parent=11 // pred_check_branch
        %245 = sbr.rel (%p243) target = $region24
      $region23: #{adaptive_conv.4} parent=11 // pred_region
        _
      $region24: #{adaptive_conv.4} parent=11 // pred_fallthru
        _
      // Predicated region
      $region25: #{adaptive_conv.4} parent=11 // pred_check
        %p246 = pneg %p166
      $region26: #{adaptive_conv.4} parent=11 // pred_check_branch
        %248 = sbr.rel (%p246) target = $region28
      $region27: #{adaptive_conv.4} parent=11 // pred_region
        _
      $region28: #{adaptive_conv.4} parent=11 // pred_fallthru
        _
    $region12: #{adaptive_conv.4} parent=5 // pred_fallthru
      _
    %p249 = scmp.lt.s32.totalorder %s14, 2
    // Predicated region
    $region29: #{adaptive_conv.4} parent=5 // pred_check
      %p250 = pneg %p249
    $region30: #{adaptive_conv.4} parent=5 // pred_check_branch
      %252 = sbr.rel (%p250) target = $region32
    $region31: #{adaptive_conv.4} parent=5 // pred_region
      // Predicated region
      $region33: #{adaptive_conv.4} parent=31 // pred_check
        %p253 = pneg %p48
      $region34: #{adaptive_conv.4} parent=31 // pred_check_branch
        %255 = sbr.rel (%p253) target = $region36
      $region35: #{adaptive_conv.4} parent=31 // pred_region
        %p256 = scmp.lt.s32.totalorder %s21, 1
        %s257 = scalar_select %p256, %s21, 1
        %p258 = scmp.lt.s32.totalorder %s22, 0
        %s259 = scalar_select %p258, %s22, 0
        %s260 = sadd.s32 %s259, %s257
        %s261 = smul.addr %s260, 2
        %s262 = scalar_lea.vmem %s0, %s261
      $region36: #{adaptive_conv.4} parent=31 // pred_fallthru
        _
      // Predicated region
      $region37: #{adaptive_conv.4} parent=31 // pred_check
        %p263 = pneg %p76
      $region38: #{adaptive_conv.4} parent=31 // pred_check_branch
        %265 = sbr.rel (%p263) target = $region40
      $region39: #{adaptive_conv.4} parent=31 // pred_region
        %p266 = scmp.lt.s32.totalorder %s21, 1
        %s267 = scalar_select %p266, %s21, 1
        %p268 = scmp.lt.s32.totalorder %s22, 0
        %s269 = scalar_select %p268, %s22, 0
        %s270 = smul.addr %s267, 4
        %s271 = sadd.s32 %s269, %s270
        %s272 = smul.addr %s271, 4
        %s273 = scalar_lea.vmem %s1, %s272
      $region40: #{adaptive_conv.4} parent=31 // pred_fallthru
        _
    $region32: #{adaptive_conv.4} parent=5 // pred_fallthru
      _
    %p274 = scmp.le.s32.totalorder 1, %s14
    %p275 = scmp.lt.s32.totalorder %s14, 3
    %p276 = pnand %p274, %p275
    %p277 = pneg %p276
    // Predicated region
    $region41: #{adaptive_conv.4} parent=5 // pred_check
      _
    $region42: #{adaptive_conv.4} parent=5 // pred_check_branch
      %279 = sbr.rel (%p276) target = $region44
    $region43: #{adaptive_conv.4} parent=5 // pred_region
      %s280 = ssub.s32 %s14, 1
      %p281 = scmp.lt.s32.totalorder %s23, 1
      %s282 = scalar_select %p281, %s23, 1
      %p283 = scmp.lt.s32.totalorder %s24, 0
      %s284 = scalar_select %p283, %s24, 0
      %s285 = sadd.s32 %s284, %s282
      %s286 = smul.addr %s285, 2
      %s287 = scalar_lea.vmem %s0, %s286
      %p288 = pneg %p54
      %p289 = pneg %p51
      %p290 = scmp.lt.s32.totalorder %s23, 1
      %s291 = scalar_select %p290, %s23, 1
      %p292 = scmp.lt.s32.totalorder %s24, 0
      %s293 = scalar_select %p292, %s24, 0
      %s294 = smul.addr %s291, 4
      %s295 = sadd.s32 %s293, %s294
      %s296 = smul.addr %s295, 4
      %s297 = scalar_lea.vmem %s1, %s296
      %p298 = pneg %p82
      %p299 = pneg %p79
      %p300 = pneg %p103
      %p301 = pneg %p100
      %p302 = pneg %p124
      %p303 = pneg %p121
      %p304 = pneg %p145
      %p305 = pneg %p142
      %p306 = pneg %p166
      %p307 = pneg %p163
      %p308 = pneg %p194
      %p309 = pneg %p191
      %p310 = scmp.lt.s32.totalorder %s23, 1
      %s311 = scalar_select %p310, %s23, 1
      %p312 = scmp.lt.s32.totalorder %s24, 0
      %s313 = scalar_select %p312, %s24, 0
      %s314 = smul.addr %s311, 2
      %s315 = sadd.s32 %s313, %s314
      %s316 = smul.addr %s315, 8
      %s317 = scalar_lea.vmem %s6, %s316
      %p318 = pneg %p222
      %p319 = pneg %p219
      %p320 = scmp.lt.s32.totalorder %s23, 1
      %s321 = scalar_select %p320, %s23, 1
      %p322 = scmp.lt.s32.totalorder %s24, 0
      %s323 = scalar_select %p322, %s24, 0
      %s324 = smul.addr %s323, 2
      %s325 = smul.addr %s321, 2
      %s326 = sadd.s32 %s324, %s325
      %s327 = smul.addr %s326, 8
      %s328 = scalar_lea.vmem %s7, %s327
      %p329 = scmp.lt.s32.totalorder %s23, 1
      %s330 = scalar_select %p329, %s23, 1
      %p331 = scmp.lt.s32.totalorder %s24, 0
      %s332 = scalar_select %p331, %s24, 0
      %s333 = sadd.s32 %s332, %s330
      %s334 = smul.addr %s333, 2
      %s335 = scalar_lea.vmem %s0, %s334
      %p336 = scmp.lt.s32.totalorder %s23, 1
      %s337 = scalar_select %p336, %s23, 1
      %p338 = scmp.lt.s32.totalorder %s24, 0
      %s339 = scalar_select %p338, %s24, 0
      %s340 = smul.addr %s337, 4
      %s341 = sadd.s32 %s339, %s340
      %s342 = smul.addr %s341, 4
      %s343 = scalar_lea.vmem %s1, %s342
      %p344 = scmp.lt.s32.totalorder %s23, 1
      %s345 = scalar_select %p344, %s23, 1
      %p346 = scmp.lt.s32.totalorder %s24, 0
      %s347 = scalar_select %p346, %s24, 0
      %s348 = smul.addr %s345, 2
      %s349 = sadd.s32 %s347, %s348
      %s350 = smul.addr %s349, 8
      %s351 = scalar_lea.vmem %s6, %s350
      %p352 = scmp.lt.s32.totalorder %s23, 1
      %s353 = scalar_select %p352, %s23, 1
      %p354 = scmp.lt.s32.totalorder %s24, 0
      %s355 = scalar_select %p354, %s24, 0
      %s356 = smul.addr %s355, 2
      %s357 = smul.addr %s353, 2
      %s358 = sadd.s32 %s356, %s357
      %s359 = smul.addr %s358, 8
      %s360 = scalar_lea.vmem %s7, %s359
      %v361 = vld [vmem:[%s2] sm:$0xff]
      %v362 = vld [vmem:[%s2 + $0x8] sm:$0xff]
      %v363 = vld [vmem:[%s343] sm:$0xf]
      %v364 = vld [vmem:[%s343 + $0x4] sm:$0xf]
      %v365 = vld [vmem:[%s343 + $0x8] sm:$0xf]
      %v366 = vld [vmem:[%s343 + $0xc] sm:$0xf]
      %v367 = vunpack.c.l.bf16 %v363
      %v368 = vunpack.c.l.bf16 %v364
      %v369 = vunpack.c.l.bf16 %v365
      %v370 = vunpack.c.l.bf16 %v366
      %vm371 = vcmask 261120
      %v373 = vsel %vm371, %v361, 0
      %v376 = vsel %vm371, %v362, 0
      %378 = vmatpush.msra.mxu0 0.0
      %379 = vmatpush.msra.mxu0 0.0
      %380 = vmatpush.msra.mxu0 0.0
      %381 = vmatpush.msra.mxu0 0.0
      %382 = vmatpush.msra.mxu0 0.0
      %383 = vmatpush.msra.mxu0 0.0
      %384 = vmatpush.msra.mxu0 0.0
      %385 = vmatpush.msra.mxu0 0.0
      %386 = vmatpush.msra.mxu0 0.0
      %387 = vmatpush.msra.mxu0 0.0
      %388 = vmatpush.msra.mxu0 0.0
      %389 = vmatpush.msra.mxu0 0.0
      %390 = vmatpush.msra.mxu0 %v370
      %391 = vmatpush.msra.mxu0 %v369
      %392 = vmatpush.msra.mxu0 %v368
      %393 = vmatpush.msra.mxu0 %v367
      %394 = vmatmul.f32.gmra.mxu0 %v373
      %v395 = vpop.f32.mrf.mxu0
      %v396 = vadd.f32 0.0, %v395
      %397 = vmatmul.f32.gmra.mxu0 %v376
      %v398 = vpop.f32.mrf.mxu0
      %v399 = vadd.f32 0.0, %v398
      %400 = vdwg.mxu0
      %v401 = vld [vmem:[%s4] sm:$0xff]
      %v402 = vld [vmem:[%s4 + $0x8] sm:$0xff]
      %404 = vset.pattern.permute.xlu0 0
      %405 = vperm.xlu0 %404, %v401
      %v406 = vpop.permute.xlu0 %405
      %409 = vset.pattern.permute.xlu0 0
      %410 = vperm.xlu0 %409, %v402
      %v411 = vpop.permute.xlu0 %410
      %v413 = vmul.f32 %v396, %v406
      %v414 = vmul.f32 %v399, %v411
      %v415 = vld [vmem:[%s5] sm:$0xff]
      %v416 = vld [vmem:[%s5 + $0x8] sm:$0xff]
      %418 = vset.pattern.permute.xlu0 0
      %419 = vperm.xlu0 %418, %v415
      %v420 = vpop.permute.xlu0 %419
      %423 = vset.pattern.permute.xlu0 0
      %424 = vperm.xlu0 %423, %v416
      %v425 = vpop.permute.xlu0 %424
      %v427 = vadd.f32 %v413, %v420
      %v428 = vadd.f32 %v414, %v425
      %vm429 = vcmp.gt.f32.partialorder %v427, 0.0
      %vm430 = vcmp.gt.f32.partialorder %v428, 0.0
      %v431 = vmul.f32 %v427, 0.2
      %v432 = vmul.f32 %v428, 0.2
      %v433 = vsel %vm429, %v427, %v431
      %v434 = vsel %vm430, %v428, %v432
      %v435 = vld [vmem:[%s335] sm:$0x3]
      %v436 = vunpack.c.l.bf16 %v435
      %v437 = vld [vmem:[%s3] sm:$0xff]
      %v438 = vld [vmem:[%s3 + $0x8] sm:$0xff]
      %v439 = vperm.slane %v436, 0
      %v440 = vmul.f32 %v433, %v439
      %v441 = vmul.f32 %v434, %v439
      %s442 = scalar_lea.vmem %s3, 16
      %v443 = vld [vmem:[%s442] sm:$0xff]
      %v444 = vld [vmem:[%s442 + $0x8] sm:$0xff]
      %v445 = vperm.slane %v436, 1
      %v446 = vmul.f32 %v433, %v445
      %v447 = vmul.f32 %v434, %v445
      %vm448 = vcmask 130048
      %v450 = vsel %vm448, %v443, 0
      %v453 = vsel %vm448, %v444, 0
      %455 = vmatpush.msra.mxu0 0.0
      %456 = vmatpush.msra.mxu0 0.0
      %457 = vmatpush.msra.mxu0 0.0
      %458 = vmatpush.msra.mxu0 0.0
      %459 = vmatpush.msra.mxu0 0.0
      %460 = vmatpush.msra.mxu0 0.0
      %461 = vmatpush.msra.mxu0 0.0
      %462 = vmatpush.msra.mxu0 0.0
      %463 = vmatpush.msra.mxu0 0.0
      %464 = vmatpush.msra.mxu0 0.0
      %465 = vmatpush.msra.mxu0 0.0
      %466 = vmatpush.msra.mxu0 0.0
      %467 = vmatpush.msra.mxu0 0.0
      %468 = vmatpush.msra.mxu0 0.0
      %469 = vmatpush.msra.mxu0 %v447
      %470 = vmatpush.msra.mxu0 %v446
      %471 = vmatmul.f32.gmra.mxu0 %v450
      %v472 = vpop.f32.mrf.mxu0
      %v473 = vadd.f32 0.0, %v472
      %474 = vmatmul.f32.gmra.mxu0 %v453
      %v475 = vpop.f32.mrf.mxu0
      %v476 = vadd.f32 0.0, %v475
      %477 = vdwg.mxu0
      %v479 = vsel %vm448, %v437, 0
      %v482 = vsel %vm448, %v438, 0
      %484 = vmatpush.msra.mxu0 0.0
      %485 = vmatpush.msra.mxu0 0.0
      %486 = vmatpush.msra.mxu0 0.0
      %487 = vmatpush.msra.mxu0 0.0
      %488 = vmatpush.msra.mxu0 0.0
      %489 = vmatpush.msra.mxu0 0.0
      %490 = vmatpush.msra.mxu0 0.0
      %491 = vmatpush.msra.mxu0 0.0
      %492 = vmatpush.msra.mxu0 0.0
      %493 = vmatpush.msra.mxu0 0.0
      %494 = vmatpush.msra.mxu0 0.0
      %495 = vmatpush.msra.mxu0 0.0
      %496 = vmatpush.msra.mxu0 0.0
      %497 = vmatpush.msra.mxu0 0.0
      %498 = vmatpush.msra.mxu0 %v441
      %499 = vmatpush.msra.mxu0 %v440
      %500 = vmatmul.f32.gmra.mxu0 %v479
      %v501 = vpop.f32.mrf.mxu0
      %v502 = vadd.f32 %v473, %v501
      %503 = vmatmul.f32.gmra.mxu0 %v482
      %v504 = vpop.f32.mrf.mxu0
      %v505 = vadd.f32 %v476, %v504
      %506 = vdwg.mxu0
      %s507 = scalar_lea.vmem %s3, 32
      %v508 = vld [vmem:[%s507] sm:$0xff]
      %v509 = vld [vmem:[%s507 + $0x8] sm:$0xff]
      %v510 = vperm.slane %v436, 2
      %v511 = vmul.f32 %v433, %v510
      %v512 = vmul.f32 %v434, %v510
      %v514 = vsel %vm448, %v508, 0
      %v517 = vsel %vm448, %v509, 0
      %519 = vmatpush.msra.mxu0 0.0
      %520 = vmatpush.msra.mxu0 0.0
      %521 = vmatpush.msra.mxu0 0.0
      %522 = vmatpush.msra.mxu0 0.0
      %523 = vmatpush.msra.mxu0 0.0
      %524 = vmatpush.msra.mxu0 0.0
      %525 = vmatpush.msra.mxu0 0.0
      %526 = vmatpush.msra.mxu0 0.0
      %527 = vmatpush.msra.mxu0 0.0
      %528 = vmatpush.msra.mxu0 0.0
      %529 = vmatpush.msra.mxu0 0.0
      %530 = vmatpush.msra.mxu0 0.0
      %531 = vmatpush.msra.mxu0 0.0
      %532 = vmatpush.msra.mxu0 0.0
      %533 = vmatpush.msra.mxu0 %v512
      %534 = vmatpush.msra.mxu0 %v511
      %535 = vmatmul.f32.gmra.mxu0 %v514
      %v536 = vpop.f32.mrf.mxu0
      %v537 = vadd.f32 0.0, %v536
      %538 = vmatmul.f32.gmra.mxu0 %v517
      %v539 = vpop.f32.mrf.mxu0
      %v540 = vadd.f32 0.0, %v539
      %541 = vdwg.mxu0
      %v542 = vadd.f32 %v502, %v537
      %v543 = vadd.f32 %v505, %v540
      %s544 = scalar_lea.vmem %s3, 48
      %v545 = vld [vmem:[%s544] sm:$0xff]
      %v546 = vld [vmem:[%s544 + $0x8] sm:$0xff]
      %v547 = vperm.slane %v436, 3
      %v548 = vmul.f32 %v433, %v547
      %v549 = vmul.f32 %v434, %v547
      %v551 = vsel %vm448, %v545, 0
      %v554 = vsel %vm448, %v546, 0
      %556 = vmatpush.msra.mxu0 0.0
      %557 = vmatpush.msra.mxu0 0.0
      %558 = vmatpush.msra.mxu0 0.0
      %559 = vmatpush.msra.mxu0 0.0
      %560 = vmatpush.msra.mxu0 0.0
      %561 = vmatpush.msra.mxu0 0.0
      %562 = vmatpush.msra.mxu0 0.0
      %563 = vmatpush.msra.mxu0 0.0
      %564 = vmatpush.msra.mxu0 0.0
      %565 = vmatpush.msra.mxu0 0.0
      %566 = vmatpush.msra.mxu0 0.0
      %567 = vmatpush.msra.mxu0 0.0
      %568 = vmatpush.msra.mxu0 0.0
      %569 = vmatpush.msra.mxu0 0.0
      %570 = vmatpush.msra.mxu0 %v549
      %571 = vmatpush.msra.mxu0 %v548
      %572 = vmatmul.f32.gmra.mxu0 %v551
      %v573 = vpop.f32.mrf.mxu0
      %v574 = vadd.f32 0.0, %v573
      %575 = vmatmul.f32.gmra.mxu0 %v554
      %v576 = vpop.f32.mrf.mxu0
      %v577 = vadd.f32 0.0, %v576
      %578 = vdwg.mxu0
      %v579 = vadd.f32 %v542, %v574
      %v580 = vadd.f32 %v543, %v577
      %581 = vst [vmem:[%s351] sm:$0xff] %v579
      %582 = vst [vmem:[%s351 + $0x8] sm:$0xff] %v580
      %583 = vadd.xlane.f32.xlu0 %v579
      %v584 = vpop.xlane.xlu0 %583
      %585 = vadd.xlane.f32.xlu0 %v580
      %v586 = vpop.xlane.xlu0 %585
      %v587 = vrcp.pop 128.0
      %v588 = vmul.f32 128.0, %v587
      %v589 = vsub.f32 1.0, %v588
      %v590 = vmul.f32 %v587, %v589
      %v591 = vadd.f32 %v587, %v590
      %vm592 = vweird.f32 %v587
      %v593 = vsel %vm592, %v587, %v591
      %v594 = vmul.f32 %v584, %v593
      %v595 = vmul.f32 %v586, %v593
      %v596 = vsub.f32 %v579, %v594
      %v597 = vsub.f32 %v580, %v595
      %v598 = vmul.f32 %v596, %v596
      %v599 = vmul.f32 %v597, %v597
      %600 = vadd.xlane.f32.xlu0 %v598
      %v601 = vpop.xlane.xlu0 %600
      %602 = vadd.xlane.f32.xlu0 %v599
      %v603 = vpop.xlane.xlu0 %602
      %vm604 = vcmask 7168
      %v605 = vsel %vm604, %v584, %v601
      %v606 = vsel %vm604, %v586, %v603
      %vm607 = vcmask 15360
      %608 = vst.msk [vmem:[%s360] sm:$0xff] %vm607, %v605
      %609 = vst.msk [vmem:[%s360 + $0x8] sm:$0xff] %vm607, %v606
      %p610 = scmp.lt.s32.totalorder %s23, 1
      %s611 = scalar_select %p610, %s23, 1
      %p612 = scmp.lt.s32.totalorder %s24, 0
      %s613 = scalar_select %p612, %s24, 0
      %s614 = smul.addr %s611, 2
      %s615 = sadd.s32 %s613, %s614
      %s616 = smul.addr %s615, 8
      %s617 = scalar_lea.vmem %s6, %s616
      %p618 = scmp.lt.s32.totalorder %s23, 1
      %s619 = scalar_select %p618, %s23, 1
      %p620 = scmp.lt.s32.totalorder %s24, 0
      %s621 = scalar_select %p620, %s24, 0
      %s622 = smul.addr %s621, 2
      %s623 = smul.addr %s619, 2
      %s624 = sadd.s32 %s622, %s623
      %s625 = smul.addr %s624, 8
      %s626 = scalar_lea.vmem %s7, %s625
      // Predicated region
      $region45: #{adaptive_conv.4} parent=43 // pred_check
        %p627 = pneg %p191
      $region46: #{adaptive_conv.4} parent=43 // pred_check_branch
        %629 = sbr.rel (%p627) target = $region48
      $region47: #{adaptive_conv.4} parent=43 // pred_region
        _
      $region48: #{adaptive_conv.4} parent=43 // pred_fallthru
        _
      // Predicated region
      $region49: #{adaptive_conv.4} parent=43 // pred_check
        %p630 = pneg %p219
      $region50: #{adaptive_conv.4} parent=43 // pred_check_branch
        %632 = sbr.rel (%p630) target = $region52
      $region51: #{adaptive_conv.4} parent=43 // pred_region
        _
      $region52: #{adaptive_conv.4} parent=43 // pred_fallthru
        _
    $region44: #{adaptive_conv.4} parent=5 // pred_fallthru
      _
    %p633 = scmp.le.s32.totalorder 2, %s14
    // Predicated region
    $region53: #{adaptive_conv.4} parent=5 // pred_check
      %p634 = pneg %p633
    $region54: #{adaptive_conv.4} parent=5 // pred_check_branch
      %636 = sbr.rel (%p634) target = $region56
    $region55: #{adaptive_conv.4} parent=5 // pred_region
      %s637 = ssub.s32 %s14, 2
      // Predicated region
      $region57: #{adaptive_conv.4} parent=55 // pred_check
        %p638 = pneg %p197
      $region58: #{adaptive_conv.4} parent=55 // pred_check_branch
        %640 = sbr.rel (%p638) target = $region60
      $region59: #{adaptive_conv.4} parent=55 // pred_region
        %p641 = scmp.lt.s32.totalorder %s25, 1
        %s642 = scalar_select %p641, %s25, 1
        %p643 = scmp.lt.s32.totalorder %s26, 0
        %s644 = scalar_select %p643, %s26, 0
        %s645 = smul.addr %s642, 2
        %s646 = sadd.s32 %s644, %s645
        %s647 = smul.addr %s646, 8
        %s648 = scalar_lea.vmem %s6, %s647
      $region60: #{adaptive_conv.4} parent=55 // pred_fallthru
        _
      // Predicated region
      $region61: #{adaptive_conv.4} parent=55 // pred_check
        %p649 = pneg %p225
      $region62: #{adaptive_conv.4} parent=55 // pred_check_branch
        %651 = sbr.rel (%p649) target = $region64
      $region63: #{adaptive_conv.4} parent=55 // pred_region
        %p652 = scmp.lt.s32.totalorder %s25, 1
        %s653 = scalar_select %p652, %s25, 1
        %p654 = scmp.lt.s32.totalorder %s26, 0
        %s655 = scalar_select %p654, %s26, 0
        %s656 = smul.addr %s655, 2
        %s657 = smul.addr %s653, 2
        %s658 = sadd.s32 %s656, %s657
        %s659 = smul.addr %s658, 8
        %s660 = scalar_lea.vmem %s7, %s659
      $region64: #{adaptive_conv.4} parent=55 // pred_fallthru
        _
    $region56: #{adaptive_conv.4} parent=5 // pred_fallthru
      _
  $region6: #{adaptive_conv.4} parent=0 // loop_footer
    %s18 = sadd.s32 1, %s14
  $region7: #{adaptive_conv.4} parent=0 // loop_footer_branch
    %13 = sbr.rel target = $region3
  $region8: #{adaptive_conv.4} parent=0 // loop_exit
    _

</llo_original>
